<compile_context>
chip_gen: v6e
topology: v6e:2x2x1
jax: 0.10.0
libtpu: 0.0.40
codegen_flags: <defaults>
</compile_context>

<pallas_src>
import jax
import jax.numpy as jnp
from jax.experimental import pallas as pl
from jax.experimental.pallas import tpu as pltpu

BN_EPS = 1e-5
KW = 24              # conv kernel width
PAD_L, PAD_R = 11, 12


def deepbind_conv_kernel(x_ref, w_ref, misc_ref, out_ref, stk_ref):
    """Conv(1->16,(4,24)) + bias -> ReLU -> BN(eval) -> global max over L.

    x_ref:    (4, Lp*B) bf16  zero-padded input block, channel-major, lanes
                              ordered (position-major, element-minor)
    w_ref:    (16, 96)  bf16  conv weight, column 4*k + h = w[c, h, k]
    misc_ref: (16, 3)   f32   columns: conv bias, BN scale, BN shift
    out_ref:  (16, B)   f32   pooled features (channels x batch elements)
    stk_ref:  (96, L*B) bf16  scratch: tap-stacked (in-VMEM im2col) operand
    """
    B = out_ref.shape[1]
    Q = stk_ref.shape[1]          # L * B conv output positions in this block
    L = Q // B

    # In-VMEM im2col: row 4*k + h of stk holds channel h shifted by tap k.
    # Every slice start (k*B) is a multiple of 128 lanes -> tile-aligned loads.
    for k in range(KW):
        stk_ref[4 * k:4 * (k + 1), :] = x_ref[:, k * B:k * B + Q]

    # The whole 4x24 convolution as ONE MXU matmul: (16,96) @ (96, L*B).
    conv = jnp.dot(w_ref[...], stk_ref[...],
                   preferred_element_type=jnp.float32)          # (16, Q) f32

    misc = misc_ref[...]
    bias, scale, shift = misc[:, 0:1], misc[:, 1:2], misc[:, 2:3]
    bn = jnp.maximum(conv + bias, 0.0) * scale + shift          # ReLU then BN

    # Global max over the L positions of each element: each position's slab is
    # a contiguous, 128-aligned B-lane slice -> plain elementwise VPU maxes.
    res = bn[:, 0:B]
    for p in range(1, L):
        res = jnp.maximum(res, bn[:, p * B:(p + 1) * B])
    out_ref[...] = res


def _block_config(n, l):
    """Pick elements-per-block B (multiple of 128) and a VMEM limit."""
    lp = l + KW - 1
    per_elem = 16 * lp + 336 * l                    # rough VMEM bytes / element
    target = max(128, (32768 // l) // 128 * 128)    # ~32K conv outputs / step
    cap = max(128, ((20 * 1024 * 1024) // per_elem) // 128 * 128)
    half = max(128, pl.cdiv(pl.cdiv(n, 2), 128) * 128)  # keep >=2 grid steps
    b = int(min(target, cap, half))
    n_blocks = pl.cdiv(n, b)
    n_pad = n_blocks * b
    vmem_limit = int(min(48 * 1024 * 1024,
                         max(32 * 1024 * 1024,
                             per_elem * b + 2 * 1024 * 1024)))
    return b, n_blocks, n_pad, vmem_limit


def _dense_head(feats, w1, b1, w2, b2):
    """Linear(16,32) -> ReLU -> Dropout(eval)=id -> Linear(32,1) -> Sigmoid."""
    # TODO(synk): Dropout(p=0.5) is a no-op in eval mode (not implemented for
    #   training); HIGHEST precision keeps kernel/reference heads bit-stable.
    h = jnp.maximum(
        jnp.dot(feats, w1, precision=jax.lax.Precision.HIGHEST) + b1, 0.0)
    return jax.nn.sigmoid(
        jnp.dot(h, w2, precision=jax.lax.Precision.HIGHEST) + b2)


def deepbind_forward(x, params):
    """x: (N, 1, 4, L) float32, NCHW as in the PyTorch module."""
    (wconv, bconv, gamma, beta, rmean, rvar, w1, b1, w2, b2) = params
    x = x.astype(jnp.float32)
    N = x.shape[0]
    L = x.shape[3]
    Lp = L + KW - 1                                   # ZeroPad2d((11,12)) width

    B, n_blocks, N_pad, vmem_limit = _block_config(N, L)

    # Channel-major bf16 layout, interleaved per block as (position, element)
    # so all in-kernel slices are 128-lane aligned:  (4, N_pad * Lp).
    xb = jnp.transpose(x[:, 0], (1, 0, 2)).astype(jnp.bfloat16)    # (4, N, L)
    xb = jnp.pad(xb, ((0, 0), (0, N_pad - N), (PAD_L, PAD_R)))     # (4, N_pad, Lp)
    xb = jnp.transpose(xb.reshape(4, n_blocks, B, Lp), (0, 1, 3, 2))
    xflat = xb.reshape(4, N_pad * Lp)

    # Conv weight stacked for the fused K=96 matmul: column 4*k + h = w[c,h,k].
    wstk = jnp.transpose(wconv, (0, 2, 1)).reshape(16, 4 * KW)
    wstk = wstk.astype(jnp.bfloat16)

    # Fold eval-mode BatchNorm statistics into a single scale/shift pair and
    # ship bias/scale/shift as ONE (16, 3) ref.
    scale = gamma * jax.lax.rsqrt(rvar + BN_EPS)
    shift = beta - rmean * scale
    misc = jnp.stack([bconv, scale, shift], axis=1).astype(jnp.float32)

    pooled = pl.pallas_call(
        deepbind_conv_kernel,
        out_shape=jax.ShapeDtypeStruct((16, N_pad), jnp.float32),
        grid_spec=pltpu.PrefetchScalarGridSpec(
            num_scalar_prefetch=0,
            grid=(n_blocks,),
            in_specs=[
                pl.BlockSpec((4, Lp * B), lambda n: (0, n)),      # padded input
                pl.BlockSpec((16, 4 * KW), lambda n: (0, 0)),     # conv weight
                pl.BlockSpec((16, 3), lambda n: (0, 0)),          # bias/scale/shift
            ],
            out_specs=pl.BlockSpec((16, B), lambda n: (0, n)),    # lane-dense
            scratch_shapes=[pltpu.VMEM((4 * KW, L * B), jnp.bfloat16)],
        ),
        compiler_params=pltpu.CompilerParams(
            dimension_semantics=("parallel",),
            vmem_limit_bytes=vmem_limit),
    )(xflat, wstk, misc)

    feats = pooled[:, :N].T                                       # (N, 16)
    return _dense_head(feats, w1, b1, w2, b2)                     # (N, 1)


def init_params(key):
    """Deterministic synthetic parameters with the module's shapes."""
    ks = jax.random.split(key, 10)
    # Conv2d(1, 16, (4, 24)) weight without the singleton in-channel.
    wconv = jax.random.normal(ks[0], (16, 4, 24), jnp.float32) * 0.1
    bconv = jax.random.normal(ks[1], (16,), jnp.float32) * 0.1
    # BatchNorm2d(16) affine params + running stats (non-trivial values).
    gamma = 1.0 + 0.1 * jax.random.normal(ks[2], (16,), jnp.float32)
    beta = 0.1 * jax.random.normal(ks[3], (16,), jnp.float32)
    rmean = 0.05 * jax.random.normal(ks[4], (16,), jnp.float32)
    rvar = jax.random.uniform(ks[5], (16,), jnp.float32, 0.5, 1.5)
    # Linear(16, 32) and Linear(32, 1); stored as (in, out) for x @ W.
    w1 = jax.random.normal(ks[6], (16, 32), jnp.float32) * 0.1
    b1 = jax.random.normal(ks[7], (32,), jnp.float32) * 0.1
    w2 = jax.random.normal(ks[8], (32, 1), jnp.float32) * 0.1
    b2 = jax.random.normal(ks[9], (1,), jnp.float32) * 0.1
    return (wconv, bconv, gamma, beta, rmean, rvar, w1, b1, w2, b2)


def deepbind_reference(x, params):
    """Pure-JAX reference of the same eval-mode forward pass."""
    (wconv, bconv, gamma, beta, rmean, rvar, w1, b1, w2, b2) = params
    x = x.astype(jnp.float32)
    # Mirror the kernel's bf16 storage of the input and conv weight.
    xb = x[:, 0].astype(jnp.bfloat16).astype(jnp.float32)          # (N, 4, L)
    wb = wconv.astype(jnp.bfloat16).astype(jnp.float32)            # (16, 4, 24)
    N, _, L = xb.shape
    xp = jnp.pad(xb, ((0, 0), (0, 0), (PAD_L, PAD_R)))             # (N, 4, L+23)
    idx = jnp.arange(L)[:, None] + jnp.arange(KW)[None, :]         # (L, 24)
    patches = xp[:, :, idx]                                        # (N, 4, L, 24)
    conv = jnp.einsum("nhlk,chk->ncl", patches, wb,
                      precision=jax.lax.Precision.HIGHEST)
    conv = jnp.maximum(conv + bconv[None, :, None], 0.0)           # bias + ReLU
    scale = gamma * jax.lax.rsqrt(rvar + BN_EPS)
    shift = beta - rmean * scale
    bn = conv * scale[None, :, None] + shift[None, :, None]        # BN (eval)
    pooled = jnp.max(bn, axis=2)                                   # (N, 16)
    return _dense_head(pooled, w1, b1, w2, b2)                     # (N, 1)


if __name__ == "__main__":
    key = jax.random.PRNGKey(0)
    kx, kp = jax.random.split(key)

    N, L = 2, 16
    x = jax.random.normal(kx, (N, 1, 4, L), jnp.float32)   # NCHW like PyTorch
    params = init_params(kp)

    out = jax.jit(deepbind_forward)(x, params)
    out = jax.block_until_ready(out)

    ref = deepbind_reference(x, params)
    assert out.shape == (N, 1)
    assert jnp.allclose(out, ref, atol=5e-5, rtol=5e-5), (out, ref)

    print("KERNEL_OK")
</pallas_src>

<mosaic_0001>
module attributes {stable_mosaic.version = 11 : i64} {
  func.func @deepbind_conv_kernel(%arg0: i32, %arg1: memref<4x4992xbf16, #tpu.memory_space<vmem>>, %arg2: memref<16x96xbf16, #tpu.memory_space<vmem>>, %arg3: memref<16x3xf32, #tpu.memory_space<vmem>>, %arg4: memref<16x128xf32, #tpu.memory_space<vmem>>, %arg5: memref<96x2048xbf16, #tpu.memory_space<vmem>>) attributes {dimension_semantics = [#tpu.dimension_semantics<parallel>], iteration_bounds = array<i64: 1>, scalar_prefetch = 0 : i64, scratch_operands = 1 : i64, tpu.core_type = #tpu.core_type<tc>, window_params = [{transform_indices = @transform_0, window_bounds = array<i64: 4, 4992>}, {pipeline_mode = #tpu.pipeline_mode<synchronous>, transform_indices = @transform_1, window_bounds = array<i64: 16, 96>}, {pipeline_mode = #tpu.pipeline_mode<synchronous>, transform_indices = @transform_2, window_bounds = array<i64: 16, 3>}, {transform_indices = @transform_3, window_bounds = array<i64: 16, 128>}]} {
    %c0 = arith.constant 0 : index
    %c0_0 = arith.constant 0 : index
    %0 = vector.load %arg1[%c0, %c0_0] : memref<4x4992xbf16, #tpu.memory_space<vmem>>, vector<4x2048xbf16>
    %c0_1 = arith.constant 0 : index
    %c0_2 = arith.constant 0 : index
    %1 = vector.load %arg5[%c0_1, %c0_2] : memref<96x2048xbf16, #tpu.memory_space<vmem>>, vector<4x2048xbf16>
    tpu.vector_store %arg5[%c0_1, %c0_2], %0 {strides = array<i32>} : memref<96x2048xbf16, #tpu.memory_space<vmem>>, vector<4x2048xbf16>,
    %c0_3 = arith.constant 0 : index
    %c128 = arith.constant 128 : index
    %2 = vector.load %arg1[%c0_3, %c128] : memref<4x4992xbf16, #tpu.memory_space<vmem>>, vector<4x2048xbf16>
    %c4 = arith.constant 4 : index
    %c0_4 = arith.constant 0 : index
    %3 = vector.load %arg5[%c4, %c0_4] : memref<96x2048xbf16, #tpu.memory_space<vmem>>, vector<4x2048xbf16>
    tpu.vector_store %arg5[%c4, %c0_4], %2 {strides = array<i32>} : memref<96x2048xbf16, #tpu.memory_space<vmem>>, vector<4x2048xbf16>,
    %c0_5 = arith.constant 0 : index
    %c256 = arith.constant 256 : index
    %4 = vector.load %arg1[%c0_5, %c256] : memref<4x4992xbf16, #tpu.memory_space<vmem>>, vector<4x2048xbf16>
    %c8 = arith.constant 8 : index
    %c0_6 = arith.constant 0 : index
    %5 = vector.load %arg5[%c8, %c0_6] : memref<96x2048xbf16, #tpu.memory_space<vmem>>, vector<4x2048xbf16>
    tpu.vector_store %arg5[%c8, %c0_6], %4 {strides = array<i32>} : memref<96x2048xbf16, #tpu.memory_space<vmem>>, vector<4x2048xbf16>,
    %c0_7 = arith.constant 0 : index
    %c384 = arith.constant 384 : index
    %6 = vector.load %arg1[%c0_7, %c384] : memref<4x4992xbf16, #tpu.memory_space<vmem>>, vector<4x2048xbf16>
    %c12 = arith.constant 12 : index
    %c0_8 = arith.constant 0 : index
    %7 = vector.load %arg5[%c12, %c0_8] : memref<96x2048xbf16, #tpu.memory_space<vmem>>, vector<4x2048xbf16>
    tpu.vector_store %arg5[%c12, %c0_8], %6 {strides = array<i32>} : memref<96x2048xbf16, #tpu.memory_space<vmem>>, vector<4x2048xbf16>,
    %c0_9 = arith.constant 0 : index
    %c512 = arith.constant 512 : index
    %8 = vector.load %arg1[%c0_9, %c512] : memref<4x4992xbf16, #tpu.memory_space<vmem>>, vector<4x2048xbf16>
    %c16 = arith.constant 16 : index
    %c0_10 = arith.constant 0 : index
    %9 = vector.load %arg5[%c16, %c0_10] : memref<96x2048xbf16, #tpu.memory_space<vmem>>, vector<4x2048xbf16>
    tpu.vector_store %arg5[%c16, %c0_10], %8 {strides = array<i32>} : memref<96x2048xbf16, #tpu.memory_space<vmem>>, vector<4x2048xbf16>,
    %c0_11 = arith.constant 0 : index
    %c640 = arith.constant 640 : index
    %10 = vector.load %arg1[%c0_11, %c640] : memref<4x4992xbf16, #tpu.memory_space<vmem>>, vector<4x2048xbf16>
    %c20 = arith.constant 20 : index
    %c0_12 = arith.constant 0 : index
    %11 = vector.load %arg5[%c20, %c0_12] : memref<96x2048xbf16, #tpu.memory_space<vmem>>, vector<4x2048xbf16>
    tpu.vector_store %arg5[%c20, %c0_12], %10 {strides = array<i32>} : memref<96x2048xbf16, #tpu.memory_space<vmem>>, vector<4x2048xbf16>,
    %c0_13 = arith.constant 0 : index
    %c768 = arith.constant 768 : index
    %12 = vector.load %arg1[%c0_13, %c768] : memref<4x4992xbf16, #tpu.memory_space<vmem>>, vector<4x2048xbf16>
    %c24 = arith.constant 24 : index
    %c0_14 = arith.constant 0 : index
    %13 = vector.load %arg5[%c24, %c0_14] : memref<96x2048xbf16, #tpu.memory_space<vmem>>, vector<4x2048xbf16>
    tpu.vector_store %arg5[%c24, %c0_14], %12 {strides = array<i32>} : memref<96x2048xbf16, #tpu.memory_space<vmem>>, vector<4x2048xbf16>,
    %c0_15 = arith.constant 0 : index
    %c896 = arith.constant 896 : index
    %14 = vector.load %arg1[%c0_15, %c896] : memref<4x4992xbf16, #tpu.memory_space<vmem>>, vector<4x2048xbf16>
    %c28 = arith.constant 28 : index
    %c0_16 = arith.constant 0 : index
    %15 = vector.load %arg5[%c28, %c0_16] : memref<96x2048xbf16, #tpu.memory_space<vmem>>, vector<4x2048xbf16>
    tpu.vector_store %arg5[%c28, %c0_16], %14 {strides = array<i32>} : memref<96x2048xbf16, #tpu.memory_space<vmem>>, vector<4x2048xbf16>,
    %c0_17 = arith.constant 0 : index
    %c1024 = arith.constant 1024 : index
    %16 = vector.load %arg1[%c0_17, %c1024] : memref<4x4992xbf16, #tpu.memory_space<vmem>>, vector<4x2048xbf16>
    %c32 = arith.constant 32 : index
    %c0_18 = arith.constant 0 : index
    %17 = vector.load %arg5[%c32, %c0_18] : memref<96x2048xbf16, #tpu.memory_space<vmem>>, vector<4x2048xbf16>
    tpu.vector_store %arg5[%c32, %c0_18], %16 {strides = array<i32>} : memref<96x2048xbf16, #tpu.memory_space<vmem>>, vector<4x2048xbf16>,
    %c0_19 = arith.constant 0 : index
    %c1152 = arith.constant 1152 : index
    %18 = vector.load %arg1[%c0_19, %c1152] : memref<4x4992xbf16, #tpu.memory_space<vmem>>, vector<4x2048xbf16>
    %c36 = arith.constant 36 : index
    %c0_20 = arith.constant 0 : index
    %19 = vector.load %arg5[%c36, %c0_20] : memref<96x2048xbf16, #tpu.memory_space<vmem>>, vector<4x2048xbf16>
    tpu.vector_store %arg5[%c36, %c0_20], %18 {strides = array<i32>} : memref<96x2048xbf16, #tpu.memory_space<vmem>>, vector<4x2048xbf16>,
    %c0_21 = arith.constant 0 : index
    %c1280 = arith.constant 1280 : index
    %20 = vector.load %arg1[%c0_21, %c1280] : memref<4x4992xbf16, #tpu.memory_space<vmem>>, vector<4x2048xbf16>
    %c40 = arith.constant 40 : index
    %c0_22 = arith.constant 0 : index
    %21 = vector.load %arg5[%c40, %c0_22] : memref<96x2048xbf16, #tpu.memory_space<vmem>>, vector<4x2048xbf16>
    tpu.vector_store %arg5[%c40, %c0_22], %20 {strides = array<i32>} : memref<96x2048xbf16, #tpu.memory_space<vmem>>, vector<4x2048xbf16>,
    %c0_23 = arith.constant 0 : index
    %c1408 = arith.constant 1408 : index
    %22 = vector.load %arg1[%c0_23, %c1408] : memref<4x4992xbf16, #tpu.memory_space<vmem>>, vector<4x2048xbf16>
    %c44 = arith.constant 44 : index
    %c0_24 = arith.constant 0 : index
    %23 = vector.load %arg5[%c44, %c0_24] : memref<96x2048xbf16, #tpu.memory_space<vmem>>, vector<4x2048xbf16>
    tpu.vector_store %arg5[%c44, %c0_24], %22 {strides = array<i32>} : memref<96x2048xbf16, #tpu.memory_space<vmem>>, vector<4x2048xbf16>,
    %c0_25 = arith.constant 0 : index
    %c1536 = arith.constant 1536 : index
    %24 = vector.load %arg1[%c0_25, %c1536] : memref<4x4992xbf16, #tpu.memory_space<vmem>>, vector<4x2048xbf16>
    %c48 = arith.constant 48 : index
    %c0_26 = arith.constant 0 : index
    %25 = vector.load %arg5[%c48, %c0_26] : memref<96x2048xbf16, #tpu.memory_space<vmem>>, vector<4x2048xbf16>
    tpu.vector_store %arg5[%c48, %c0_26], %24 {strides = array<i32>} : memref<96x2048xbf16, #tpu.memory_space<vmem>>, vector<4x2048xbf16>,
    %c0_27 = arith.constant 0 : index
    %c1664 = arith.constant 1664 : index
    %26 = vector.load %arg1[%c0_27, %c1664] : memref<4x4992xbf16, #tpu.memory_space<vmem>>, vector<4x2048xbf16>
    %c52 = arith.constant 52 : index
    %c0_28 = arith.constant 0 : index
    %27 = vector.load %arg5[%c52, %c0_28] : memref<96x2048xbf16, #tpu.memory_space<vmem>>, vector<4x2048xbf16>
    tpu.vector_store %arg5[%c52, %c0_28], %26 {strides = array<i32>} : memref<96x2048xbf16, #tpu.memory_space<vmem>>, vector<4x2048xbf16>,
    %c0_29 = arith.constant 0 : index
    %c1792 = arith.constant 1792 : index
    %28 = vector.load %arg1[%c0_29, %c1792] : memref<4x4992xbf16, #tpu.memory_space<vmem>>, vector<4x2048xbf16>
    %c56 = arith.constant 56 : index
    %c0_30 = arith.constant 0 : index
    %29 = vector.load %arg5[%c56, %c0_30] : memref<96x2048xbf16, #tpu.memory_space<vmem>>, vector<4x2048xbf16>
    tpu.vector_store %arg5[%c56, %c0_30], %28 {strides = array<i32>} : memref<96x2048xbf16, #tpu.memory_space<vmem>>, vector<4x2048xbf16>,
    %c0_31 = arith.constant 0 : index
    %c1920 = arith.constant 1920 : index
    %30 = vector.load %arg1[%c0_31, %c1920] : memref<4x4992xbf16, #tpu.memory_space<vmem>>, vector<4x2048xbf16>
    %c60 = arith.constant 60 : index
    %c0_32 = arith.constant 0 : index
    %31 = vector.load %arg5[%c60, %c0_32] : memref<96x2048xbf16, #tpu.memory_space<vmem>>, vector<4x2048xbf16>
    tpu.vector_store %arg5[%c60, %c0_32], %30 {strides = array<i32>} : memref<96x2048xbf16, #tpu.memory_space<vmem>>, vector<4x2048xbf16>,
    %c0_33 = arith.constant 0 : index
    %c2048 = arith.constant 2048 : index
    %32 = vector.load %arg1[%c0_33, %c2048] : memref<4x4992xbf16, #tpu.memory_space<vmem>>, vector<4x2048xbf16>
    %c64 = arith.constant 64 : index
    %c0_34 = arith.constant 0 : index
    %33 = vector.load %arg5[%c64, %c0_34] : memref<96x2048xbf16, #tpu.memory_space<vmem>>, vector<4x2048xbf16>
    tpu.vector_store %arg5[%c64, %c0_34], %32 {strides = array<i32>} : memref<96x2048xbf16, #tpu.memory_space<vmem>>, vector<4x2048xbf16>,
    %c0_35 = arith.constant 0 : index
    %c2176 = arith.constant 2176 : index
    %34 = vector.load %arg1[%c0_35, %c2176] : memref<4x4992xbf16, #tpu.memory_space<vmem>>, vector<4x2048xbf16>
    %c68 = arith.constant 68 : index
    %c0_36 = arith.constant 0 : index
    %35 = vector.load %arg5[%c68, %c0_36] : memref<96x2048xbf16, #tpu.memory_space<vmem>>, vector<4x2048xbf16>
    tpu.vector_store %arg5[%c68, %c0_36], %34 {strides = array<i32>} : memref<96x2048xbf16, #tpu.memory_space<vmem>>, vector<4x2048xbf16>,
    %c0_37 = arith.constant 0 : index
    %c2304 = arith.constant 2304 : index
    %36 = vector.load %arg1[%c0_37, %c2304] : memref<4x4992xbf16, #tpu.memory_space<vmem>>, vector<4x2048xbf16>
    %c72 = arith.constant 72 : index
    %c0_38 = arith.constant 0 : index
    %37 = vector.load %arg5[%c72, %c0_38] : memref<96x2048xbf16, #tpu.memory_space<vmem>>, vector<4x2048xbf16>
    tpu.vector_store %arg5[%c72, %c0_38], %36 {strides = array<i32>} : memref<96x2048xbf16, #tpu.memory_space<vmem>>, vector<4x2048xbf16>,
    %c0_39 = arith.constant 0 : index
    %c2432 = arith.constant 2432 : index
    %38 = vector.load %arg1[%c0_39, %c2432] : memref<4x4992xbf16, #tpu.memory_space<vmem>>, vector<4x2048xbf16>
    %c76 = arith.constant 76 : index
    %c0_40 = arith.constant 0 : index
    %39 = vector.load %arg5[%c76, %c0_40] : memref<96x2048xbf16, #tpu.memory_space<vmem>>, vector<4x2048xbf16>
    tpu.vector_store %arg5[%c76, %c0_40], %38 {strides = array<i32>} : memref<96x2048xbf16, #tpu.memory_space<vmem>>, vector<4x2048xbf16>,
    %c0_41 = arith.constant 0 : index
    %c2560 = arith.constant 2560 : index
    %40 = vector.load %arg1[%c0_41, %c2560] : memref<4x4992xbf16, #tpu.memory_space<vmem>>, vector<4x2048xbf16>
    %c80 = arith.constant 80 : index
    %c0_42 = arith.constant 0 : index
    %41 = vector.load %arg5[%c80, %c0_42] : memref<96x2048xbf16, #tpu.memory_space<vmem>>, vector<4x2048xbf16>
    tpu.vector_store %arg5[%c80, %c0_42], %40 {strides = array<i32>} : memref<96x2048xbf16, #tpu.memory_space<vmem>>, vector<4x2048xbf16>,
    %c0_43 = arith.constant 0 : index
    %c2688 = arith.constant 2688 : index
    %42 = vector.load %arg1[%c0_43, %c2688] : memref<4x4992xbf16, #tpu.memory_space<vmem>>, vector<4x2048xbf16>
    %c84 = arith.constant 84 : index
    %c0_44 = arith.constant 0 : index
    %43 = vector.load %arg5[%c84, %c0_44] : memref<96x2048xbf16, #tpu.memory_space<vmem>>, vector<4x2048xbf16>
    tpu.vector_store %arg5[%c84, %c0_44], %42 {strides = array<i32>} : memref<96x2048xbf16, #tpu.memory_space<vmem>>, vector<4x2048xbf16>,
    %c0_45 = arith.constant 0 : index
    %c2816 = arith.constant 2816 : index
    %44 = vector.load %arg1[%c0_45, %c2816] : memref<4x4992xbf16, #tpu.memory_space<vmem>>, vector<4x2048xbf16>
    %c88 = arith.constant 88 : index
    %c0_46 = arith.constant 0 : index
    %45 = vector.load %arg5[%c88, %c0_46] : memref<96x2048xbf16, #tpu.memory_space<vmem>>, vector<4x2048xbf16>
    tpu.vector_store %arg5[%c88, %c0_46], %44 {strides = array<i32>} : memref<96x2048xbf16, #tpu.memory_space<vmem>>, vector<4x2048xbf16>,
    %c0_47 = arith.constant 0 : index
    %c2944 = arith.constant 2944 : index
    %46 = vector.load %arg1[%c0_47, %c2944] : memref<4x4992xbf16, #tpu.memory_space<vmem>>, vector<4x2048xbf16>
    %c92 = arith.constant 92 : index
    %c0_48 = arith.constant 0 : index
    %47 = vector.load %arg5[%c92, %c0_48] : memref<96x2048xbf16, #tpu.memory_space<vmem>>, vector<4x2048xbf16>
    tpu.vector_store %arg5[%c92, %c0_48], %46 {strides = array<i32>} : memref<96x2048xbf16, #tpu.memory_space<vmem>>, vector<4x2048xbf16>,
    %c0_49 = arith.constant 0 : index
    %c0_50 = arith.constant 0 : index
    %48 = vector.load %arg2[%c0_49, %c0_50] : memref<16x96xbf16, #tpu.memory_space<vmem>>, vector<16x96xbf16>
    %c0_51 = arith.constant 0 : index
    %c0_52 = arith.constant 0 : index
    %49 = vector.load %arg5[%c0_51, %c0_52] : memref<96x2048xbf16, #tpu.memory_space<vmem>>, vector<96x2048xbf16>
    %cst = arith.constant dense<0.000000e+00> : vector<16x2048xf32>
    %50 = tpu.matmul %48, %49, %cst {dimension_numbers = #tpu.dot_dimension_numbers<[1], [0], [0], [1], [0, 0, 1, 1], [], []>} : vector<16x96xbf16>, vector<96x2048xbf16>, vector<16x2048xf32> -> vector<16x2048xf32>
    %c0_53 = arith.constant 0 : index
    %c0_54 = arith.constant 0 : index
    %51 = vector.load %arg3[%c0_53, %c0_54] : memref<16x3xf32, #tpu.memory_space<vmem>>, vector<16x3xf32>
    %52 = vector.extract_strided_slice %51 {offsets = [0, 0], sizes = [16, 1], strides = [1, 1]} : vector<16x3xf32> to vector<16x1xf32>
    %53 = vector.extract_strided_slice %51 {offsets = [0, 1], sizes = [16, 1], strides = [1, 1]} : vector<16x3xf32> to vector<16x1xf32>
    %54 = vector.extract_strided_slice %51 {offsets = [0, 2], sizes = [16, 1], strides = [1, 1]} : vector<16x3xf32> to vector<16x1xf32>
    %55 = vector.broadcast %52 : vector<16x1xf32> to vector<16x2048xf32>
    %56 = arith.addf %50, %55 : vector<16x2048xf32>
    %cst_55 = arith.constant 0.000000e+00 : f32
    %57 = vector.broadcast %cst_55 : f32 to vector<16x2048xf32>
    %58 = arith.maximumf %56, %57 : vector<16x2048xf32>
    %59 = vector.broadcast %53 : vector<16x1xf32> to vector<16x2048xf32>
    %60 = arith.mulf %58, %59 : vector<16x2048xf32>
    %61 = vector.broadcast %54 : vector<16x1xf32> to vector<16x2048xf32>
    %62 = arith.addf %60, %61 : vector<16x2048xf32>
    %63 = vector.extract_strided_slice %62 {offsets = [0, 0], sizes = [16, 128], strides = [1, 1]} : vector<16x2048xf32> to vector<16x128xf32>
    %64 = vector.extract_strided_slice %62 {offsets = [0, 128], sizes = [16, 128], strides = [1, 1]} : vector<16x2048xf32> to vector<16x128xf32>
    %65 = arith.maximumf %63, %64 : vector<16x128xf32>
    %66 = vector.extract_strided_slice %62 {offsets = [0, 256], sizes = [16, 128], strides = [1, 1]} : vector<16x2048xf32> to vector<16x128xf32>
    %67 = arith.maximumf %65, %66 : vector<16x128xf32>
    %68 = vector.extract_strided_slice %62 {offsets = [0, 384], sizes = [16, 128], strides = [1, 1]} : vector<16x2048xf32> to vector<16x128xf32>
    %69 = arith.maximumf %67, %68 : vector<16x128xf32>
    %70 = vector.extract_strided_slice %62 {offsets = [0, 512], sizes = [16, 128], strides = [1, 1]} : vector<16x2048xf32> to vector<16x128xf32>
    %71 = arith.maximumf %69, %70 : vector<16x128xf32>
    %72 = vector.extract_strided_slice %62 {offsets = [0, 640], sizes = [16, 128], strides = [1, 1]} : vector<16x2048xf32> to vector<16x128xf32>
    %73 = arith.maximumf %71, %72 : vector<16x128xf32>
    %74 = vector.extract_strided_slice %62 {offsets = [0, 768], sizes = [16, 128], strides = [1, 1]} : vector<16x2048xf32> to vector<16x128xf32>
    %75 = arith.maximumf %73, %74 : vector<16x128xf32>
    %76 = vector.extract_strided_slice %62 {offsets = [0, 896], sizes = [16, 128], strides = [1, 1]} : vector<16x2048xf32> to vector<16x128xf32>
    %77 = arith.maximumf %75, %76 : vector<16x128xf32>
    %78 = vector.extract_strided_slice %62 {offsets = [0, 1024], sizes = [16, 128], strides = [1, 1]} : vector<16x2048xf32> to vector<16x128xf32>
    %79 = arith.maximumf %77, %78 : vector<16x128xf32>
    %80 = vector.extract_strided_slice %62 {offsets = [0, 1152], sizes = [16, 128], strides = [1, 1]} : vector<16x2048xf32> to vector<16x128xf32>
    %81 = arith.maximumf %79, %80 : vector<16x128xf32>
    %82 = vector.extract_strided_slice %62 {offsets = [0, 1280], sizes = [16, 128], strides = [1, 1]} : vector<16x2048xf32> to vector<16x128xf32>
    %83 = arith.maximumf %81, %82 : vector<16x128xf32>
    %84 = vector.extract_strided_slice %62 {offsets = [0, 1408], sizes = [16, 128], strides = [1, 1]} : vector<16x2048xf32> to vector<16x128xf32>
    %85 = arith.maximumf %83, %84 : vector<16x128xf32>
    %86 = vector.extract_strided_slice %62 {offsets = [0, 1536], sizes = [16, 128], strides = [1, 1]} : vector<16x2048xf32> to vector<16x128xf32>
    %87 = arith.maximumf %85, %86 : vector<16x128xf32>
    %88 = vector.extract_strided_slice %62 {offsets = [0, 1664], sizes = [16, 128], strides = [1, 1]} : vector<16x2048xf32> to vector<16x128xf32>
    %89 = arith.maximumf %87, %88 : vector<16x128xf32>
    %90 = vector.extract_strided_slice %62 {offsets = [0, 1792], sizes = [16, 128], strides = [1, 1]} : vector<16x2048xf32> to vector<16x128xf32>
    %91 = arith.maximumf %89, %90 : vector<16x128xf32>
    %92 = vector.extract_strided_slice %62 {offsets = [0, 1920], sizes = [16, 128], strides = [1, 1]} : vector<16x2048xf32> to vector<16x128xf32>
    %93 = arith.maximumf %91, %92 : vector<16x128xf32>
    %c0_56 = arith.constant 0 : index
    %c0_57 = arith.constant 0 : index
    %94 = vector.load %arg4[%c0_56, %c0_57] : memref<16x128xf32, #tpu.memory_space<vmem>>, vector<16x128xf32>
    tpu.vector_store %arg4[%c0_56, %c0_57], %93 {strides = array<i32>} : memref<16x128xf32, #tpu.memory_space<vmem>>, vector<16x128xf32>,
    return
  }
  func.func @transform_0(%arg0: i32) -> (i32, i32) {
    %c0_i32 = arith.constant 0 : i32
    %c0_i32_0 = arith.constant 0 : i32
    return %c0_i32, %arg0 : i32, i32
  }
  func.func @transform_1(%arg0: i32) -> (i32, i32) {
    %c0_i32 = arith.constant 0 : i32
    %c0_i32_0 = arith.constant 0 : i32
    %c0_i32_1 = arith.constant 0 : i32
    return %c0_i32, %c0_i32_0 : i32, i32
  }
  func.func @transform_2(%arg0: i32) -> (i32, i32) {
    %c0_i32 = arith.constant 0 : i32
    %c0_i32_0 = arith.constant 0 : i32
    %c0_i32_1 = arith.constant 0 : i32
    return %c0_i32, %c0_i32_0 : i32, i32
  }
  func.func @transform_3(%arg0: i32) -> (i32, i32) {
    %c0_i32 = arith.constant 0 : i32
    %c0_i32_0 = arith.constant 0 : i32
    return %c0_i32, %arg0 : i32, i32
  }
}

</mosaic_0001>

<llo_original>
// kernel: deepbind_forward.1
$region0: #{deepbind_forward.1}
  #allocation0 [shape = 'u32[]', space=smem, size = 0x4, offset = 0x4, fixed_abs, tag = 'smem constant byte address 0x4 - core index']
  #allocation1 [shape = 'u32[144,128]{1,0:T(1,128)}', space=vmem, size = 0x12000, scoped, tag = 'internal scratch']
  #allocation2 [shape = 'bf16[96,2048]{1,0:T(8,128)(2,1)}', space=vmem, size = 0x60000, scoped, tag = 'scratch operand']
  %s0 = inlined_call_operand.vmem [shape: bf16[4,4992], index: 0, kind: input, shape index: {}]
  %s1 = inlined_call_operand.vmem [shape: bf16[16,96], index: 1, kind: input, shape index: {}]
  %s2 = inlined_call_operand.vmem [shape: f32[16,3], index: 2, kind: input, shape index: {}]
  %s3 = inlined_call_operand.vmem [shape: f32[16,128], index: 3, kind: output, shape index: {}]
  %s4 = sld [smem:[#allocation0]]
  $region22: #{deepbind_forward.1} parent=0
    _
  %s6 = ssub.s32 1, %s4
  %s7 = scalar_select 0, %s6, %s4
  // Predicated region
  $region2: #{deepbind_forward.1} parent=0 // pred_check
    _
  $region3: #{deepbind_forward.1} parent=0 // pred_check_branch
    %9 = sbr.rel (0) target = $region5
  $region4: #{deepbind_forward.1} parent=0 // pred_region
    _
  $region5: #{deepbind_forward.1} parent=0 // pred_fallthru
    _
  // Predicated region
  $region6: #{deepbind_forward.1} parent=0 // pred_check
    _
  $region7: #{deepbind_forward.1} parent=0 // pred_check_branch
    %11 = sbr.rel (0) target = $region9
  $region8: #{deepbind_forward.1} parent=0 // pred_region
    _
  $region9: #{deepbind_forward.1} parent=0 // pred_fallthru
    _
  // Predicated region
  $region10: #{deepbind_forward.1} parent=0 // pred_check
    _
  $region11: #{deepbind_forward.1} parent=0 // pred_check_branch
    %13 = sbr.rel (0) target = $region13
  $region12: #{deepbind_forward.1} parent=0 // pred_region
    _
  $region13: #{deepbind_forward.1} parent=0 // pred_fallthru
    _
  %v15 = vld [vmem:[%s0] sm:$0xff]
  %v16 = vld [vmem:[%s0 + $0x8] sm:$0xff]
  %v17 = vld [vmem:[%s0 + $0x10] sm:$0xff]
  %v18 = vld [vmem:[%s0 + $0x18] sm:$0xff]
  %v23 = vcombine.high %v15, %v15
  %v25 = vunpack.c.l.s4 1983009808
  %v26 = vunpack.c.0.s8 %v25
  %v27 = vlaneseq
  %v28 = vshrl.u32 %v27, 7
  %v29 = vsub.s32 %v26, %v28
  %v30 = vrot.slane %v15, %v29
  %v32 = vunpack.c.l.s4 1983009808
  %v33 = vunpack.c.0.s8 %v32
  %v34 = vlaneseq
  %v35 = vshrl.u32 %v34, 7
  %v36 = vsub.s32 %v33, %v35
  %v37 = vrot.slane %v23, %v36
  %v38 = vcombine.high %v16, %v16
  %v40 = vunpack.c.l.s4 1983009808
  %v41 = vunpack.c.0.s8 %v40
  %v42 = vlaneseq
  %v43 = vshrl.u32 %v42, 7
  %v44 = vsub.s32 %v41, %v43
  %v45 = vrot.slane %v16, %v44
  %v47 = vunpack.c.l.s4 1983009808
  %v48 = vunpack.c.0.s8 %v47
  %v49 = vlaneseq
  %v50 = vshrl.u32 %v49, 7
  %v51 = vsub.s32 %v48, %v50
  %v52 = vrot.slane %v38, %v51
  %v53 = vcombine.high %v17, %v17
  %v55 = vunpack.c.l.s4 1983009808
  %v56 = vunpack.c.0.s8 %v55
  %v57 = vlaneseq
  %v58 = vshrl.u32 %v57, 7
  %v59 = vsub.s32 %v56, %v58
  %v60 = vrot.slane %v17, %v59
  %v62 = vunpack.c.l.s4 1983009808
  %v63 = vunpack.c.0.s8 %v62
  %v64 = vlaneseq
  %v65 = vshrl.u32 %v64, 7
  %v66 = vsub.s32 %v63, %v65
  %v67 = vrot.slane %v53, %v66
  %v68 = vcombine.high %v18, %v18
  %v70 = vunpack.c.l.s4 1983009808
  %v71 = vunpack.c.0.s8 %v70
  %v72 = vlaneseq
  %v73 = vshrl.u32 %v72, 7
  %v74 = vsub.s32 %v71, %v73
  %v75 = vrot.slane %v18, %v74
  %v77 = vunpack.c.l.s4 1983009808
  %v78 = vunpack.c.0.s8 %v77
  %v79 = vlaneseq
  %v80 = vshrl.u32 %v79, 7
  %v81 = vsub.s32 %v78, %v80
  %v82 = vrot.slane %v68, %v81
  %91 = vst [vmem:[#allocation2] sm:$0x33] %v30
  %92 = vst [vmem:[#allocation2 + $0x8] sm:$0x33] %v37
  %93 = vst [vmem:[#allocation2 + $0x10] sm:$0x33] %v45
  %94 = vst [vmem:[#allocation2 + $0x18] sm:$0x33] %v52
  %95 = vst [vmem:[#allocation2 + $0x20] sm:$0x33] %v60
  %96 = vst [vmem:[#allocation2 + $0x28] sm:$0x33] %v67
  %97 = vst [vmem:[#allocation2 + $0x30] sm:$0x33] %v75
  %98 = vst [vmem:[#allocation2 + $0x38] sm:$0x33] %v82
  %v99 = vld [vmem:[%s0 + $0x2] sm:$0xff]
  %v100 = vld [vmem:[%s0 + $0xa] sm:$0xff]
  %v101 = vld [vmem:[%s0 + $0x12] sm:$0xff]
  %v102 = vld [vmem:[%s0 + $0x1a] sm:$0xff]
  %v107 = vcombine.low %v99, %v99
  %v109 = vunpack.c.l.s4 1983009808
  %v110 = vunpack.c.0.s8 %v109
  %v111 = vlaneseq
  %v112 = vshrl.u32 %v111, 7
  %v113 = vsub.s32 %v110, %v112
  %v114 = vrot.slane %v107, %v113
  %v116 = vunpack.c.l.s4 1983009808
  %v117 = vunpack.c.0.s8 %v116
  %v118 = vlaneseq
  %v119 = vshrl.u32 %v118, 7
  %v120 = vsub.s32 %v117, %v119
  %v121 = vrot.slane %v99, %v120
  %v122 = vcombine.low %v100, %v100
  %v124 = vunpack.c.l.s4 1983009808
  %v125 = vunpack.c.0.s8 %v124
  %v126 = vlaneseq
  %v127 = vshrl.u32 %v126, 7
  %v128 = vsub.s32 %v125, %v127
  %v129 = vrot.slane %v122, %v128
  %v131 = vunpack.c.l.s4 1983009808
  %v132 = vunpack.c.0.s8 %v131
  %v133 = vlaneseq
  %v134 = vshrl.u32 %v133, 7
  %v135 = vsub.s32 %v132, %v134
  %v136 = vrot.slane %v100, %v135
  %v137 = vcombine.low %v101, %v101
  %v139 = vunpack.c.l.s4 1983009808
  %v140 = vunpack.c.0.s8 %v139
  %v141 = vlaneseq
  %v142 = vshrl.u32 %v141, 7
  %v143 = vsub.s32 %v140, %v142
  %v144 = vrot.slane %v137, %v143
  %v146 = vunpack.c.l.s4 1983009808
  %v147 = vunpack.c.0.s8 %v146
  %v148 = vlaneseq
  %v149 = vshrl.u32 %v148, 7
  %v150 = vsub.s32 %v147, %v149
  %v151 = vrot.slane %v101, %v150
  %v152 = vcombine.low %v102, %v102
  %v154 = vunpack.c.l.s4 1983009808
  %v155 = vunpack.c.0.s8 %v154
  %v156 = vlaneseq
  %v157 = vshrl.u32 %v156, 7
  %v158 = vsub.s32 %v155, %v157
  %v159 = vrot.slane %v152, %v158
  %v161 = vunpack.c.l.s4 1983009808
  %v162 = vunpack.c.0.s8 %v161
  %v163 = vlaneseq
  %v164 = vshrl.u32 %v163, 7
  %v165 = vsub.s32 %v162, %v164
  %v166 = vrot.slane %v102, %v165
  %175 = vst [vmem:[#allocation2] sm:$0xcc] %v114
  %176 = vst [vmem:[#allocation2 + $0x8] sm:$0xcc] %v121
  %177 = vst [vmem:[#allocation2 + $0x10] sm:$0xcc] %v129
  %178 = vst [vmem:[#allocation2 + $0x18] sm:$0xcc] %v136
  %179 = vst [vmem:[#allocation2 + $0x20] sm:$0xcc] %v144
  %180 = vst [vmem:[#allocation2 + $0x28] sm:$0xcc] %v151
  %181 = vst [vmem:[#allocation2 + $0x30] sm:$0xcc] %v159
  %182 = vst [vmem:[#allocation2 + $0x38] sm:$0xcc] %v166
  %v183 = vld [vmem:[%s0 + $0x4] sm:$0xff]
  %v184 = vld [vmem:[%s0 + $0xc] sm:$0xff]
  %v185 = vld [vmem:[%s0 + $0x14] sm:$0xff]
  %v186 = vld [vmem:[%s0 + $0x1c] sm:$0xff]
  %v191 = vcombine.high %v183, %v183
  %v193 = vunpack.c.l.s4 1983009808
  %v194 = vunpack.c.0.s8 %v193
  %v195 = vlaneseq
  %v196 = vshrl.u32 %v195, 7
  %v197 = vsub.s32 %v194, %v196
  %v198 = vrot.slane %v183, %v197
  %v200 = vunpack.c.l.s4 1983009808
  %v201 = vunpack.c.0.s8 %v200
  %v202 = vlaneseq
  %v203 = vshrl.u32 %v202, 7
  %v204 = vsub.s32 %v201, %v203
  %v205 = vrot.slane %v191, %v204
  %v206 = vcombine.high %v184, %v184
  %v208 = vunpack.c.l.s4 1983009808
  %v209 = vunpack.c.0.s8 %v208
  %v210 = vlaneseq
  %v211 = vshrl.u32 %v210, 7
  %v212 = vsub.s32 %v209, %v211
  %v213 = vrot.slane %v184, %v212
  %v215 = vunpack.c.l.s4 1983009808
  %v216 = vunpack.c.0.s8 %v215
  %v217 = vlaneseq
  %v218 = vshrl.u32 %v217, 7
  %v219 = vsub.s32 %v216, %v218
  %v220 = vrot.slane %v206, %v219
  %v221 = vcombine.high %v185, %v185
  %v223 = vunpack.c.l.s4 1983009808
  %v224 = vunpack.c.0.s8 %v223
  %v225 = vlaneseq
  %v226 = vshrl.u32 %v225, 7
  %v227 = vsub.s32 %v224, %v226
  %v228 = vrot.slane %v185, %v227
  %v230 = vunpack.c.l.s4 1983009808
  %v231 = vunpack.c.0.s8 %v230
  %v232 = vlaneseq
  %v233 = vshrl.u32 %v232, 7
  %v234 = vsub.s32 %v231, %v233
  %v235 = vrot.slane %v221, %v234
  %v236 = vcombine.high %v186, %v186
  %v238 = vunpack.c.l.s4 1983009808
  %v239 = vunpack.c.0.s8 %v238
  %v240 = vlaneseq
  %v241 = vshrl.u32 %v240, 7
  %v242 = vsub.s32 %v239, %v241
  %v243 = vrot.slane %v186, %v242
  %v245 = vunpack.c.l.s4 1983009808
  %v246 = vunpack.c.0.s8 %v245
  %v247 = vlaneseq
  %v248 = vshrl.u32 %v247, 7
  %v249 = vsub.s32 %v246, %v248
  %v250 = vrot.slane %v236, %v249
  %259 = vst [vmem:[#allocation2 + $0x40] sm:$0x33] %v198
  %260 = vst [vmem:[#allocation2 + $0x48] sm:$0x33] %v205
  %261 = vst [vmem:[#allocation2 + $0x50] sm:$0x33] %v213
  %262 = vst [vmem:[#allocation2 + $0x58] sm:$0x33] %v220
  %263 = vst [vmem:[#allocation2 + $0x60] sm:$0x33] %v228
  %264 = vst [vmem:[#allocation2 + $0x68] sm:$0x33] %v235
  %265 = vst [vmem:[#allocation2 + $0x70] sm:$0x33] %v243
  %266 = vst [vmem:[#allocation2 + $0x78] sm:$0x33] %v250
  %v267 = vld [vmem:[%s0 + $0x6] sm:$0xff]
  %v268 = vld [vmem:[%s0 + $0xe] sm:$0xff]
  %v269 = vld [vmem:[%s0 + $0x16] sm:$0xff]
  %v270 = vld [vmem:[%s0 + $0x1e] sm:$0xff]
  %v275 = vcombine.low %v267, %v267
  %v277 = vunpack.c.l.s4 1983009808
  %v278 = vunpack.c.0.s8 %v277
  %v279 = vlaneseq
  %v280 = vshrl.u32 %v279, 7
  %v281 = vsub.s32 %v278, %v280
  %v282 = vrot.slane %v275, %v281
  %v284 = vunpack.c.l.s4 1983009808
  %v285 = vunpack.c.0.s8 %v284
  %v286 = vlaneseq
  %v287 = vshrl.u32 %v286, 7
  %v288 = vsub.s32 %v285, %v287
  %v289 = vrot.slane %v267, %v288
  %v290 = vcombine.low %v268, %v268
  %v292 = vunpack.c.l.s4 1983009808
  %v293 = vunpack.c.0.s8 %v292
  %v294 = vlaneseq
  %v295 = vshrl.u32 %v294, 7
  %v296 = vsub.s32 %v293, %v295
  %v297 = vrot.slane %v290, %v296
  %v299 = vunpack.c.l.s4 1983009808
  %v300 = vunpack.c.0.s8 %v299
  %v301 = vlaneseq
  %v302 = vshrl.u32 %v301, 7
  %v303 = vsub.s32 %v300, %v302
  %v304 = vrot.slane %v268, %v303
  %v305 = vcombine.low %v269, %v269
  %v307 = vunpack.c.l.s4 1983009808
  %v308 = vunpack.c.0.s8 %v307
  %v309 = vlaneseq
  %v310 = vshrl.u32 %v309, 7
  %v311 = vsub.s32 %v308, %v310
  %v312 = vrot.slane %v305, %v311
  %v314 = vunpack.c.l.s4 1983009808
  %v315 = vunpack.c.0.s8 %v314
  %v316 = vlaneseq
  %v317 = vshrl.u32 %v316, 7
  %v318 = vsub.s32 %v315, %v317
  %v319 = vrot.slane %v269, %v318
  %v320 = vcombine.low %v270, %v270
  %v322 = vunpack.c.l.s4 1983009808
  %v323 = vunpack.c.0.s8 %v322
  %v324 = vlaneseq
  %v325 = vshrl.u32 %v324, 7
  %v326 = vsub.s32 %v323, %v325
  %v327 = vrot.slane %v320, %v326
  %v329 = vunpack.c.l.s4 1983009808
  %v330 = vunpack.c.0.s8 %v329
  %v331 = vlaneseq
  %v332 = vshrl.u32 %v331, 7
  %v333 = vsub.s32 %v330, %v332
  %v334 = vrot.slane %v270, %v333
  %343 = vst [vmem:[#allocation2 + $0x40] sm:$0xcc] %v282
  %344 = vst [vmem:[#allocation2 + $0x48] sm:$0xcc] %v289
  %345 = vst [vmem:[#allocation2 + $0x50] sm:$0xcc] %v297
  %346 = vst [vmem:[#allocation2 + $0x58] sm:$0xcc] %v304
  %347 = vst [vmem:[#allocation2 + $0x60] sm:$0xcc] %v312
  %348 = vst [vmem:[#allocation2 + $0x68] sm:$0xcc] %v319
  %349 = vst [vmem:[#allocation2 + $0x70] sm:$0xcc] %v327
  %350 = vst [vmem:[#allocation2 + $0x78] sm:$0xcc] %v334
  %v351 = vld [vmem:[%s0 + $0x8] sm:$0xff]
  %v352 = vld [vmem:[%s0 + $0x10] sm:$0xff]
  %v353 = vld [vmem:[%s0 + $0x18] sm:$0xff]
  %v354 = vld [vmem:[%s0 + $0x20] sm:$0xff]
  %v359 = vcombine.high %v351, %v351
  %v361 = vunpack.c.l.s4 1983009808
  %v362 = vunpack.c.0.s8 %v361
  %v363 = vlaneseq
  %v364 = vshrl.u32 %v363, 7
  %v365 = vsub.s32 %v362, %v364
  %v366 = vrot.slane %v351, %v365
  %v368 = vunpack.c.l.s4 1983009808
  %v369 = vunpack.c.0.s8 %v368
  %v370 = vlaneseq
  %v371 = vshrl.u32 %v370, 7
  %v372 = vsub.s32 %v369, %v371
  %v373 = vrot.slane %v359, %v372
  %v374 = vcombine.high %v352, %v352
  %v376 = vunpack.c.l.s4 1983009808
  %v377 = vunpack.c.0.s8 %v376
  %v378 = vlaneseq
  %v379 = vshrl.u32 %v378, 7
  %v380 = vsub.s32 %v377, %v379
  %v381 = vrot.slane %v352, %v380
  %v383 = vunpack.c.l.s4 1983009808
  %v384 = vunpack.c.0.s8 %v383
  %v385 = vlaneseq
  %v386 = vshrl.u32 %v385, 7
  %v387 = vsub.s32 %v384, %v386
  %v388 = vrot.slane %v374, %v387
  %v389 = vcombine.high %v353, %v353
  %v391 = vunpack.c.l.s4 1983009808
  %v392 = vunpack.c.0.s8 %v391
  %v393 = vlaneseq
  %v394 = vshrl.u32 %v393, 7
  %v395 = vsub.s32 %v392, %v394
  %v396 = vrot.slane %v353, %v395
  %v398 = vunpack.c.l.s4 1983009808
  %v399 = vunpack.c.0.s8 %v398
  %v400 = vlaneseq
  %v401 = vshrl.u32 %v400, 7
  %v402 = vsub.s32 %v399, %v401
  %v403 = vrot.slane %v389, %v402
  %v404 = vcombine.high %v354, %v354
  %v406 = vunpack.c.l.s4 1983009808
  %v407 = vunpack.c.0.s8 %v406
  %v408 = vlaneseq
  %v409 = vshrl.u32 %v408, 7
  %v410 = vsub.s32 %v407, %v409
  %v411 = vrot.slane %v354, %v410
  %v413 = vunpack.c.l.s4 1983009808
  %v414 = vunpack.c.0.s8 %v413
  %v415 = vlaneseq
  %v416 = vshrl.u32 %v415, 7
  %v417 = vsub.s32 %v414, %v416
  %v418 = vrot.slane %v404, %v417
  %427 = vst [vmem:[#allocation2 + $0x80] sm:$0x33] %v366
  %428 = vst [vmem:[#allocation2 + $0x88] sm:$0x33] %v373
  %429 = vst [vmem:[#allocation2 + $0x90] sm:$0x33] %v381
  %430 = vst [vmem:[#allocation2 + $0x98] sm:$0x33] %v388
  %431 = vst [vmem:[#allocation2 + $0xa0] sm:$0x33] %v396
  %432 = vst [vmem:[#allocation2 + $0xa8] sm:$0x33] %v403
  %433 = vst [vmem:[#allocation2 + $0xb0] sm:$0x33] %v411
  %434 = vst [vmem:[#allocation2 + $0xb8] sm:$0x33] %v418
  %v435 = vld [vmem:[%s0 + $0xa] sm:$0xff]
  %v436 = vld [vmem:[%s0 + $0x12] sm:$0xff]
  %v437 = vld [vmem:[%s0 + $0x1a] sm:$0xff]
  %v438 = vld [vmem:[%s0 + $0x22] sm:$0xff]
  %v443 = vcombine.low %v435, %v435
  %v445 = vunpack.c.l.s4 1983009808
  %v446 = vunpack.c.0.s8 %v445
  %v447 = vlaneseq
  %v448 = vshrl.u32 %v447, 7
  %v449 = vsub.s32 %v446, %v448
  %v450 = vrot.slane %v443, %v449
  %v452 = vunpack.c.l.s4 1983009808
  %v453 = vunpack.c.0.s8 %v452
  %v454 = vlaneseq
  %v455 = vshrl.u32 %v454, 7
  %v456 = vsub.s32 %v453, %v455
  %v457 = vrot.slane %v435, %v456
  %v458 = vcombine.low %v436, %v436
  %v460 = vunpack.c.l.s4 1983009808
  %v461 = vunpack.c.0.s8 %v460
  %v462 = vlaneseq
  %v463 = vshrl.u32 %v462, 7
  %v464 = vsub.s32 %v461, %v463
  %v465 = vrot.slane %v458, %v464
  %v467 = vunpack.c.l.s4 1983009808
  %v468 = vunpack.c.0.s8 %v467
  %v469 = vlaneseq
  %v470 = vshrl.u32 %v469, 7
  %v471 = vsub.s32 %v468, %v470
  %v472 = vrot.slane %v436, %v471
  %v473 = vcombine.low %v437, %v437
  %v475 = vunpack.c.l.s4 1983009808
  %v476 = vunpack.c.0.s8 %v475
  %v477 = vlaneseq
  %v478 = vshrl.u32 %v477, 7
  %v479 = vsub.s32 %v476, %v478
  %v480 = vrot.slane %v473, %v479
  %v482 = vunpack.c.l.s4 1983009808
  %v483 = vunpack.c.0.s8 %v482
  %v484 = vlaneseq
  %v485 = vshrl.u32 %v484, 7
  %v486 = vsub.s32 %v483, %v485
  %v487 = vrot.slane %v437, %v486
  %v488 = vcombine.low %v438, %v438
  %v490 = vunpack.c.l.s4 1983009808
  %v491 = vunpack.c.0.s8 %v490
  %v492 = vlaneseq
  %v493 = vshrl.u32 %v492, 7
  %v494 = vsub.s32 %v491, %v493
  %v495 = vrot.slane %v488, %v494
  %v497 = vunpack.c.l.s4 1983009808
  %v498 = vunpack.c.0.s8 %v497
  %v499 = vlaneseq
  %v500 = vshrl.u32 %v499, 7
  %v501 = vsub.s32 %v498, %v500
  %v502 = vrot.slane %v438, %v501
  %511 = vst [vmem:[#allocation2 + $0x80] sm:$0xcc] %v450
  %512 = vst [vmem:[#allocation2 + $0x88] sm:$0xcc] %v457
  %513 = vst [vmem:[#allocation2 + $0x90] sm:$0xcc] %v465
  %514 = vst [vmem:[#allocation2 + $0x98] sm:$0xcc] %v472
  %515 = vst [vmem:[#allocation2 + $0xa0] sm:$0xcc] %v480
  %516 = vst [vmem:[#allocation2 + $0xa8] sm:$0xcc] %v487
  %517 = vst [vmem:[#allocation2 + $0xb0] sm:$0xcc] %v495
  %518 = vst [vmem:[#allocation2 + $0xb8] sm:$0xcc] %v502
  %v519 = vld [vmem:[%s0 + $0xc] sm:$0xff]
  %v520 = vld [vmem:[%s0 + $0x14] sm:$0xff]
  %v521 = vld [vmem:[%s0 + $0x1c] sm:$0xff]
  %v522 = vld [vmem:[%s0 + $0x24] sm:$0xff]
  %v527 = vcombine.high %v519, %v519
  %v529 = vunpack.c.l.s4 1983009808
  %v530 = vunpack.c.0.s8 %v529
  %v531 = vlaneseq
  %v532 = vshrl.u32 %v531, 7
  %v533 = vsub.s32 %v530, %v532
  %v534 = vrot.slane %v519, %v533
  %v536 = vunpack.c.l.s4 1983009808
  %v537 = vunpack.c.0.s8 %v536
  %v538 = vlaneseq
  %v539 = vshrl.u32 %v538, 7
  %v540 = vsub.s32 %v537, %v539
  %v541 = vrot.slane %v527, %v540
  %v542 = vcombine.high %v520, %v520
  %v544 = vunpack.c.l.s4 1983009808
  %v545 = vunpack.c.0.s8 %v544
  %v546 = vlaneseq
  %v547 = vshrl.u32 %v546, 7
  %v548 = vsub.s32 %v545, %v547
  %v549 = vrot.slane %v520, %v548
  %v551 = vunpack.c.l.s4 1983009808
  %v552 = vunpack.c.0.s8 %v551
  %v553 = vlaneseq
  %v554 = vshrl.u32 %v553, 7
  %v555 = vsub.s32 %v552, %v554
  %v556 = vrot.slane %v542, %v555
  %v557 = vcombine.high %v521, %v521
  %v559 = vunpack.c.l.s4 1983009808
  %v560 = vunpack.c.0.s8 %v559
  %v561 = vlaneseq
  %v562 = vshrl.u32 %v561, 7
  %v563 = vsub.s32 %v560, %v562
  %v564 = vrot.slane %v521, %v563
  %v566 = vunpack.c.l.s4 1983009808
  %v567 = vunpack.c.0.s8 %v566
  %v568 = vlaneseq
  %v569 = vshrl.u32 %v568, 7
  %v570 = vsub.s32 %v567, %v569
  %v571 = vrot.slane %v557, %v570
  %v572 = vcombine.high %v522, %v522
  %v574 = vunpack.c.l.s4 1983009808
  %v575 = vunpack.c.0.s8 %v574
  %v576 = vlaneseq
  %v577 = vshrl.u32 %v576, 7
  %v578 = vsub.s32 %v575, %v577
  %v579 = vrot.slane %v522, %v578
  %v581 = vunpack.c.l.s4 1983009808
  %v582 = vunpack.c.0.s8 %v581
  %v583 = vlaneseq
  %v584 = vshrl.u32 %v583, 7
  %v585 = vsub.s32 %v582, %v584
  %v586 = vrot.slane %v572, %v585
  %595 = vst [vmem:[#allocation2 + $0xc0] sm:$0x33] %v534
  %596 = vst [vmem:[#allocation2 + $0xc8] sm:$0x33] %v541
  %597 = vst [vmem:[#allocation2 + $0xd0] sm:$0x33] %v549
  %598 = vst [vmem:[#allocation2 + $0xd8] sm:$0x33] %v556
  %599 = vst [vmem:[#allocation2 + $0xe0] sm:$0x33] %v564
  %600 = vst [vmem:[#allocation2 + $0xe8] sm:$0x33] %v571
  %601 = vst [vmem:[#allocation2 + $0xf0] sm:$0x33] %v579
  %602 = vst [vmem:[#allocation2 + $0xf8] sm:$0x33] %v586
  %v603 = vld [vmem:[%s0 + $0xe] sm:$0xff]
  %v604 = vld [vmem:[%s0 + $0x16] sm:$0xff]
  %v605 = vld [vmem:[%s0 + $0x1e] sm:$0xff]
  %v606 = vld [vmem:[%s0 + $0x26] sm:$0xff]
  %v611 = vcombine.low %v603, %v603
  %v613 = vunpack.c.l.s4 1983009808
  %v614 = vunpack.c.0.s8 %v613
  %v615 = vlaneseq
  %v616 = vshrl.u32 %v615, 7
  %v617 = vsub.s32 %v614, %v616
  %v618 = vrot.slane %v611, %v617
  %v620 = vunpack.c.l.s4 1983009808
  %v621 = vunpack.c.0.s8 %v620
  %v622 = vlaneseq
  %v623 = vshrl.u32 %v622, 7
  %v624 = vsub.s32 %v621, %v623
  %v625 = vrot.slane %v603, %v624
  %v626 = vcombine.low %v604, %v604
  %v628 = vunpack.c.l.s4 1983009808
  %v629 = vunpack.c.0.s8 %v628
  %v630 = vlaneseq
  %v631 = vshrl.u32 %v630, 7
  %v632 = vsub.s32 %v629, %v631
  %v633 = vrot.slane %v626, %v632
  %v635 = vunpack.c.l.s4 1983009808
  %v636 = vunpack.c.0.s8 %v635
  %v637 = vlaneseq
  %v638 = vshrl.u32 %v637, 7
  %v639 = vsub.s32 %v636, %v638
  %v640 = vrot.slane %v604, %v639
  %v641 = vcombine.low %v605, %v605
  %v643 = vunpack.c.l.s4 1983009808
  %v644 = vunpack.c.0.s8 %v643
  %v645 = vlaneseq
  %v646 = vshrl.u32 %v645, 7
  %v647 = vsub.s32 %v644, %v646
  %v648 = vrot.slane %v641, %v647
  %v650 = vunpack.c.l.s4 1983009808
  %v651 = vunpack.c.0.s8 %v650
  %v652 = vlaneseq
  %v653 = vshrl.u32 %v652, 7
  %v654 = vsub.s32 %v651, %v653
  %v655 = vrot.slane %v605, %v654
  %v656 = vcombine.low %v606, %v606
  %v658 = vunpack.c.l.s4 1983009808
  %v659 = vunpack.c.0.s8 %v658
  %v660 = vlaneseq
  %v661 = vshrl.u32 %v660, 7
  %v662 = vsub.s32 %v659, %v661
  %v663 = vrot.slane %v656, %v662
  %v665 = vunpack.c.l.s4 1983009808
  %v666 = vunpack.c.0.s8 %v665
  %v667 = vlaneseq
  %v668 = vshrl.u32 %v667, 7
  %v669 = vsub.s32 %v666, %v668
  %v670 = vrot.slane %v606, %v669
  %679 = vst [vmem:[#allocation2 + $0xc0] sm:$0xcc] %v618
  %680 = vst [vmem:[#allocation2 + $0xc8] sm:$0xcc] %v625
  %681 = vst [vmem:[#allocation2 + $0xd0] sm:$0xcc] %v633
  %682 = vst [vmem:[#allocation2 + $0xd8] sm:$0xcc] %v640
  %683 = vst [vmem:[#allocation2 + $0xe0] sm:$0xcc] %v648
  %684 = vst [vmem:[#allocation2 + $0xe8] sm:$0xcc] %v655
  %685 = vst [vmem:[#allocation2 + $0xf0] sm:$0xcc] %v663
  %686 = vst [vmem:[#allocation2 + $0xf8] sm:$0xcc] %v670
  %v687 = vld [vmem:[%s0 + $0x10] sm:$0xff]
  %v688 = vld [vmem:[%s0 + $0x18] sm:$0xff]
  %v689 = vld [vmem:[%s0 + $0x20] sm:$0xff]
  %v690 = vld [vmem:[%s0 + $0x28] sm:$0xff]
  %v695 = vcombine.high %v687, %v687
  %v697 = vunpack.c.l.s4 1983009808
  %v698 = vunpack.c.0.s8 %v697
  %v699 = vlaneseq
  %v700 = vshrl.u32 %v699, 7
  %v701 = vsub.s32 %v698, %v700
  %v702 = vrot.slane %v687, %v701
  %v704 = vunpack.c.l.s4 1983009808
  %v705 = vunpack.c.0.s8 %v704
  %v706 = vlaneseq
  %v707 = vshrl.u32 %v706, 7
  %v708 = vsub.s32 %v705, %v707
  %v709 = vrot.slane %v695, %v708
  %v710 = vcombine.high %v688, %v688
  %v712 = vunpack.c.l.s4 1983009808
  %v713 = vunpack.c.0.s8 %v712
  %v714 = vlaneseq
  %v715 = vshrl.u32 %v714, 7
  %v716 = vsub.s32 %v713, %v715
  %v717 = vrot.slane %v688, %v716
  %v719 = vunpack.c.l.s4 1983009808
  %v720 = vunpack.c.0.s8 %v719
  %v721 = vlaneseq
  %v722 = vshrl.u32 %v721, 7
  %v723 = vsub.s32 %v720, %v722
  %v724 = vrot.slane %v710, %v723
  %v725 = vcombine.high %v689, %v689
  %v727 = vunpack.c.l.s4 1983009808
  %v728 = vunpack.c.0.s8 %v727
  %v729 = vlaneseq
  %v730 = vshrl.u32 %v729, 7
  %v731 = vsub.s32 %v728, %v730
  %v732 = vrot.slane %v689, %v731
  %v734 = vunpack.c.l.s4 1983009808
  %v735 = vunpack.c.0.s8 %v734
  %v736 = vlaneseq
  %v737 = vshrl.u32 %v736, 7
  %v738 = vsub.s32 %v735, %v737
  %v739 = vrot.slane %v725, %v738
  %v740 = vcombine.high %v690, %v690
  %v742 = vunpack.c.l.s4 1983009808
  %v743 = vunpack.c.0.s8 %v742
  %v744 = vlaneseq
  %v745 = vshrl.u32 %v744, 7
  %v746 = vsub.s32 %v743, %v745
  %v747 = vrot.slane %v690, %v746
  %v749 = vunpack.c.l.s4 1983009808
  %v750 = vunpack.c.0.s8 %v749
  %v751 = vlaneseq
  %v752 = vshrl.u32 %v751, 7
  %v753 = vsub.s32 %v750, %v752
  %v754 = vrot.slane %v740, %v753
  %763 = vst [vmem:[#allocation2 + $0x100] sm:$0x33] %v702
  %764 = vst [vmem:[#allocation2 + $0x108] sm:$0x33] %v709
  %765 = vst [vmem:[#allocation2 + $0x110] sm:$0x33] %v717
  %766 = vst [vmem:[#allocation2 + $0x118] sm:$0x33] %v724
  %767 = vst [vmem:[#allocation2 + $0x120] sm:$0x33] %v732
  %768 = vst [vmem:[#allocation2 + $0x128] sm:$0x33] %v739
  %769 = vst [vmem:[#allocation2 + $0x130] sm:$0x33] %v747
  %770 = vst [vmem:[#allocation2 + $0x138] sm:$0x33] %v754
  %v771 = vld [vmem:[%s0 + $0x12] sm:$0xff]
  %v772 = vld [vmem:[%s0 + $0x1a] sm:$0xff]
  %v773 = vld [vmem:[%s0 + $0x22] sm:$0xff]
  %v774 = vld [vmem:[%s0 + $0x2a] sm:$0xff]
  %v779 = vcombine.low %v771, %v771
  %v781 = vunpack.c.l.s4 1983009808
  %v782 = vunpack.c.0.s8 %v781
  %v783 = vlaneseq
  %v784 = vshrl.u32 %v783, 7
  %v785 = vsub.s32 %v782, %v784
  %v786 = vrot.slane %v779, %v785
  %v788 = vunpack.c.l.s4 1983009808
  %v789 = vunpack.c.0.s8 %v788
  %v790 = vlaneseq
  %v791 = vshrl.u32 %v790, 7
  %v792 = vsub.s32 %v789, %v791
  %v793 = vrot.slane %v771, %v792
  %v794 = vcombine.low %v772, %v772
  %v796 = vunpack.c.l.s4 1983009808
  %v797 = vunpack.c.0.s8 %v796
  %v798 = vlaneseq
  %v799 = vshrl.u32 %v798, 7
  %v800 = vsub.s32 %v797, %v799
  %v801 = vrot.slane %v794, %v800
  %v803 = vunpack.c.l.s4 1983009808
  %v804 = vunpack.c.0.s8 %v803
  %v805 = vlaneseq
  %v806 = vshrl.u32 %v805, 7
  %v807 = vsub.s32 %v804, %v806
  %v808 = vrot.slane %v772, %v807
  %v809 = vcombine.low %v773, %v773
  %v811 = vunpack.c.l.s4 1983009808
  %v812 = vunpack.c.0.s8 %v811
  %v813 = vlaneseq
  %v814 = vshrl.u32 %v813, 7
  %v815 = vsub.s32 %v812, %v814
  %v816 = vrot.slane %v809, %v815
  %v818 = vunpack.c.l.s4 1983009808
  %v819 = vunpack.c.0.s8 %v818
  %v820 = vlaneseq
  %v821 = vshrl.u32 %v820, 7
  %v822 = vsub.s32 %v819, %v821
  %v823 = vrot.slane %v773, %v822
  %v824 = vcombine.low %v774, %v774
  %v826 = vunpack.c.l.s4 1983009808
  %v827 = vunpack.c.0.s8 %v826
  %v828 = vlaneseq
  %v829 = vshrl.u32 %v828, 7
  %v830 = vsub.s32 %v827, %v829
  %v831 = vrot.slane %v824, %v830
  %v833 = vunpack.c.l.s4 1983009808
  %v834 = vunpack.c.0.s8 %v833
  %v835 = vlaneseq
  %v836 = vshrl.u32 %v835, 7
  %v837 = vsub.s32 %v834, %v836
  %v838 = vrot.slane %v774, %v837
  %847 = vst [vmem:[#allocation2 + $0x100] sm:$0xcc] %v786
  %848 = vst [vmem:[#allocation2 + $0x108] sm:$0xcc] %v793
  %849 = vst [vmem:[#allocation2 + $0x110] sm:$0xcc] %v801
  %850 = vst [vmem:[#allocation2 + $0x118] sm:$0xcc] %v808
  %851 = vst [vmem:[#allocation2 + $0x120] sm:$0xcc] %v816
  %852 = vst [vmem:[#allocation2 + $0x128] sm:$0xcc] %v823
  %853 = vst [vmem:[#allocation2 + $0x130] sm:$0xcc] %v831
  %854 = vst [vmem:[#allocation2 + $0x138] sm:$0xcc] %v838
  %v855 = vld [vmem:[%s0 + $0x14] sm:$0xff]
  %v856 = vld [vmem:[%s0 + $0x1c] sm:$0xff]
  %v857 = vld [vmem:[%s0 + $0x24] sm:$0xff]
  %v858 = vld [vmem:[%s0 + $0x2c] sm:$0xff]
  %v863 = vcombine.high %v855, %v855
  %v865 = vunpack.c.l.s4 1983009808
  %v866 = vunpack.c.0.s8 %v865
  %v867 = vlaneseq
  %v868 = vshrl.u32 %v867, 7
  %v869 = vsub.s32 %v866, %v868
  %v870 = vrot.slane %v855, %v869
  %v872 = vunpack.c.l.s4 1983009808
  %v873 = vunpack.c.0.s8 %v872
  %v874 = vlaneseq
  %v875 = vshrl.u32 %v874, 7
  %v876 = vsub.s32 %v873, %v875
  %v877 = vrot.slane %v863, %v876
  %v878 = vcombine.high %v856, %v856
  %v880 = vunpack.c.l.s4 1983009808
  %v881 = vunpack.c.0.s8 %v880
  %v882 = vlaneseq
  %v883 = vshrl.u32 %v882, 7
  %v884 = vsub.s32 %v881, %v883
  %v885 = vrot.slane %v856, %v884
  %v887 = vunpack.c.l.s4 1983009808
  %v888 = vunpack.c.0.s8 %v887
  %v889 = vlaneseq
  %v890 = vshrl.u32 %v889, 7
  %v891 = vsub.s32 %v888, %v890
  %v892 = vrot.slane %v878, %v891
  %v893 = vcombine.high %v857, %v857
  %v895 = vunpack.c.l.s4 1983009808
  %v896 = vunpack.c.0.s8 %v895
  %v897 = vlaneseq
  %v898 = vshrl.u32 %v897, 7
  %v899 = vsub.s32 %v896, %v898
  %v900 = vrot.slane %v857, %v899
  %v902 = vunpack.c.l.s4 1983009808
  %v903 = vunpack.c.0.s8 %v902
  %v904 = vlaneseq
  %v905 = vshrl.u32 %v904, 7
  %v906 = vsub.s32 %v903, %v905
  %v907 = vrot.slane %v893, %v906
  %v908 = vcombine.high %v858, %v858
  %v910 = vunpack.c.l.s4 1983009808
  %v911 = vunpack.c.0.s8 %v910
  %v912 = vlaneseq
  %v913 = vshrl.u32 %v912, 7
  %v914 = vsub.s32 %v911, %v913
  %v915 = vrot.slane %v858, %v914
  %v917 = vunpack.c.l.s4 1983009808
  %v918 = vunpack.c.0.s8 %v917
  %v919 = vlaneseq
  %v920 = vshrl.u32 %v919, 7
  %v921 = vsub.s32 %v918, %v920
  %v922 = vrot.slane %v908, %v921
  %931 = vst [vmem:[#allocation2 + $0x140] sm:$0x33] %v870
  %932 = vst [vmem:[#allocation2 + $0x148] sm:$0x33] %v877
  %933 = vst [vmem:[#allocation2 + $0x150] sm:$0x33] %v885
  %934 = vst [vmem:[#allocation2 + $0x158] sm:$0x33] %v892
  %935 = vst [vmem:[#allocation2 + $0x160] sm:$0x33] %v900
  %936 = vst [vmem:[#allocation2 + $0x168] sm:$0x33] %v907
  %937 = vst [vmem:[#allocation2 + $0x170] sm:$0x33] %v915
  %938 = vst [vmem:[#allocation2 + $0x178] sm:$0x33] %v922
  %v939 = vld [vmem:[%s0 + $0x16] sm:$0xff]
  %v940 = vld [vmem:[%s0 + $0x1e] sm:$0xff]
  %v941 = vld [vmem:[%s0 + $0x26] sm:$0xff]
  %v942 = vld [vmem:[%s0 + $0x2e] sm:$0xff]
  %v947 = vcombine.low %v939, %v939
  %v949 = vunpack.c.l.s4 1983009808
  %v950 = vunpack.c.0.s8 %v949
  %v951 = vlaneseq
  %v952 = vshrl.u32 %v951, 7
  %v953 = vsub.s32 %v950, %v952
  %v954 = vrot.slane %v947, %v953
  %v956 = vunpack.c.l.s4 1983009808
  %v957 = vunpack.c.0.s8 %v956
  %v958 = vlaneseq
  %v959 = vshrl.u32 %v958, 7
  %v960 = vsub.s32 %v957, %v959
  %v961 = vrot.slane %v939, %v960
  %v962 = vcombine.low %v940, %v940
  %v964 = vunpack.c.l.s4 1983009808
  %v965 = vunpack.c.0.s8 %v964
  %v966 = vlaneseq
  %v967 = vshrl.u32 %v966, 7
  %v968 = vsub.s32 %v965, %v967
  %v969 = vrot.slane %v962, %v968
  %v971 = vunpack.c.l.s4 1983009808
  %v972 = vunpack.c.0.s8 %v971
  %v973 = vlaneseq
  %v974 = vshrl.u32 %v973, 7
  %v975 = vsub.s32 %v972, %v974
  %v976 = vrot.slane %v940, %v975
  %v977 = vcombine.low %v941, %v941
  %v979 = vunpack.c.l.s4 1983009808
  %v980 = vunpack.c.0.s8 %v979
  %v981 = vlaneseq
  %v982 = vshrl.u32 %v981, 7
  %v983 = vsub.s32 %v980, %v982
  %v984 = vrot.slane %v977, %v983
  %v986 = vunpack.c.l.s4 1983009808
  %v987 = vunpack.c.0.s8 %v986
  %v988 = vlaneseq
  %v989 = vshrl.u32 %v988, 7
  %v990 = vsub.s32 %v987, %v989
  %v991 = vrot.slane %v941, %v990
  %v992 = vcombine.low %v942, %v942
  %v994 = vunpack.c.l.s4 1983009808
  %v995 = vunpack.c.0.s8 %v994
  %v996 = vlaneseq
  %v997 = vshrl.u32 %v996, 7
  %v998 = vsub.s32 %v995, %v997
  %v999 = vrot.slane %v992, %v998
  %v1001 = vunpack.c.l.s4 1983009808
  %v1002 = vunpack.c.0.s8 %v1001
  %v1003 = vlaneseq
  %v1004 = vshrl.u32 %v1003, 7
  %v1005 = vsub.s32 %v1002, %v1004
  %v1006 = vrot.slane %v942, %v1005
  %1015 = vst [vmem:[#allocation2 + $0x140] sm:$0xcc] %v954
  %1016 = vst [vmem:[#allocation2 + $0x148] sm:$0xcc] %v961
  %1017 = vst [vmem:[#allocation2 + $0x150] sm:$0xcc] %v969
  %1018 = vst [vmem:[#allocation2 + $0x158] sm:$0xcc] %v976
  %1019 = vst [vmem:[#allocation2 + $0x160] sm:$0xcc] %v984
  %1020 = vst [vmem:[#allocation2 + $0x168] sm:$0xcc] %v991
  %1021 = vst [vmem:[#allocation2 + $0x170] sm:$0xcc] %v999
  %1022 = vst [vmem:[#allocation2 + $0x178] sm:$0xcc] %v1006
  %v1023 = vld [vmem:[%s0 + $0x18] sm:$0xff]
  %v1024 = vld [vmem:[%s0 + $0x20] sm:$0xff]
  %v1025 = vld [vmem:[%s0 + $0x28] sm:$0xff]
  %v1026 = vld [vmem:[%s0 + $0x30] sm:$0xff]
  %v1031 = vcombine.high %v1023, %v1023
  %v1033 = vunpack.c.l.s4 1983009808
  %v1034 = vunpack.c.0.s8 %v1033
  %v1035 = vlaneseq
  %v1036 = vshrl.u32 %v1035, 7
  %v1037 = vsub.s32 %v1034, %v1036
  %v1038 = vrot.slane %v1023, %v1037
  %v1040 = vunpack.c.l.s4 1983009808
  %v1041 = vunpack.c.0.s8 %v1040
  %v1042 = vlaneseq
  %v1043 = vshrl.u32 %v1042, 7
  %v1044 = vsub.s32 %v1041, %v1043
  %v1045 = vrot.slane %v1031, %v1044
  %v1046 = vcombine.high %v1024, %v1024
  %v1048 = vunpack.c.l.s4 1983009808
  %v1049 = vunpack.c.0.s8 %v1048
  %v1050 = vlaneseq
  %v1051 = vshrl.u32 %v1050, 7
  %v1052 = vsub.s32 %v1049, %v1051
  %v1053 = vrot.slane %v1024, %v1052
  %v1055 = vunpack.c.l.s4 1983009808
  %v1056 = vunpack.c.0.s8 %v1055
  %v1057 = vlaneseq
  %v1058 = vshrl.u32 %v1057, 7
  %v1059 = vsub.s32 %v1056, %v1058
  %v1060 = vrot.slane %v1046, %v1059
  %v1061 = vcombine.high %v1025, %v1025
  %v1063 = vunpack.c.l.s4 1983009808
  %v1064 = vunpack.c.0.s8 %v1063
  %v1065 = vlaneseq
  %v1066 = vshrl.u32 %v1065, 7
  %v1067 = vsub.s32 %v1064, %v1066
  %v1068 = vrot.slane %v1025, %v1067
  %v1070 = vunpack.c.l.s4 1983009808
  %v1071 = vunpack.c.0.s8 %v1070
  %v1072 = vlaneseq
  %v1073 = vshrl.u32 %v1072, 7
  %v1074 = vsub.s32 %v1071, %v1073
  %v1075 = vrot.slane %v1061, %v1074
  %v1076 = vcombine.high %v1026, %v1026
  %v1078 = vunpack.c.l.s4 1983009808
  %v1079 = vunpack.c.0.s8 %v1078
  %v1080 = vlaneseq
  %v1081 = vshrl.u32 %v1080, 7
  %v1082 = vsub.s32 %v1079, %v1081
  %v1083 = vrot.slane %v1026, %v1082
  %v1085 = vunpack.c.l.s4 1983009808
  %v1086 = vunpack.c.0.s8 %v1085
  %v1087 = vlaneseq
  %v1088 = vshrl.u32 %v1087, 7
  %v1089 = vsub.s32 %v1086, %v1088
  %v1090 = vrot.slane %v1076, %v1089
  %1099 = vst [vmem:[#allocation2 + $0x180] sm:$0x33] %v1038
  %1100 = vst [vmem:[#allocation2 + $0x188] sm:$0x33] %v1045
  %1101 = vst [vmem:[#allocation2 + $0x190] sm:$0x33] %v1053
  %1102 = vst [vmem:[#allocation2 + $0x198] sm:$0x33] %v1060
  %1103 = vst [vmem:[#allocation2 + $0x1a0] sm:$0x33] %v1068
  %1104 = vst [vmem:[#allocation2 + $0x1a8] sm:$0x33] %v1075
  %1105 = vst [vmem:[#allocation2 + $0x1b0] sm:$0x33] %v1083
  %1106 = vst [vmem:[#allocation2 + $0x1b8] sm:$0x33] %v1090
  %v1107 = vld [vmem:[%s0 + $0x1a] sm:$0xff]
  %v1108 = vld [vmem:[%s0 + $0x22] sm:$0xff]
  %v1109 = vld [vmem:[%s0 + $0x2a] sm:$0xff]
  %v1110 = vld [vmem:[%s0 + $0x32] sm:$0xff]
  %v1115 = vcombine.low %v1107, %v1107
  %v1117 = vunpack.c.l.s4 1983009808
  %v1118 = vunpack.c.0.s8 %v1117
  %v1119 = vlaneseq
  %v1120 = vshrl.u32 %v1119, 7
  %v1121 = vsub.s32 %v1118, %v1120
  %v1122 = vrot.slane %v1115, %v1121
  %v1124 = vunpack.c.l.s4 1983009808
  %v1125 = vunpack.c.0.s8 %v1124
  %v1126 = vlaneseq
  %v1127 = vshrl.u32 %v1126, 7
  %v1128 = vsub.s32 %v1125, %v1127
  %v1129 = vrot.slane %v1107, %v1128
  %v1130 = vcombine.low %v1108, %v1108
  %v1132 = vunpack.c.l.s4 1983009808
  %v1133 = vunpack.c.0.s8 %v1132
  %v1134 = vlaneseq
  %v1135 = vshrl.u32 %v1134, 7
  %v1136 = vsub.s32 %v1133, %v1135
  %v1137 = vrot.slane %v1130, %v1136
  %v1139 = vunpack.c.l.s4 1983009808
  %v1140 = vunpack.c.0.s8 %v1139
  %v1141 = vlaneseq
  %v1142 = vshrl.u32 %v1141, 7
  %v1143 = vsub.s32 %v1140, %v1142
  %v1144 = vrot.slane %v1108, %v1143
  %v1145 = vcombine.low %v1109, %v1109
  %v1147 = vunpack.c.l.s4 1983009808
  %v1148 = vunpack.c.0.s8 %v1147
  %v1149 = vlaneseq
  %v1150 = vshrl.u32 %v1149, 7
  %v1151 = vsub.s32 %v1148, %v1150
  %v1152 = vrot.slane %v1145, %v1151
  %v1154 = vunpack.c.l.s4 1983009808
  %v1155 = vunpack.c.0.s8 %v1154
  %v1156 = vlaneseq
  %v1157 = vshrl.u32 %v1156, 7
  %v1158 = vsub.s32 %v1155, %v1157
  %v1159 = vrot.slane %v1109, %v1158
  %v1160 = vcombine.low %v1110, %v1110
  %v1162 = vunpack.c.l.s4 1983009808
  %v1163 = vunpack.c.0.s8 %v1162
  %v1164 = vlaneseq
  %v1165 = vshrl.u32 %v1164, 7
  %v1166 = vsub.s32 %v1163, %v1165
  %v1167 = vrot.slane %v1160, %v1166
  %v1169 = vunpack.c.l.s4 1983009808
  %v1170 = vunpack.c.0.s8 %v1169
  %v1171 = vlaneseq
  %v1172 = vshrl.u32 %v1171, 7
  %v1173 = vsub.s32 %v1170, %v1172
  %v1174 = vrot.slane %v1110, %v1173
  %1183 = vst [vmem:[#allocation2 + $0x180] sm:$0xcc] %v1122
  %1184 = vst [vmem:[#allocation2 + $0x188] sm:$0xcc] %v1129
  %1185 = vst [vmem:[#allocation2 + $0x190] sm:$0xcc] %v1137
  %1186 = vst [vmem:[#allocation2 + $0x198] sm:$0xcc] %v1144
  %1187 = vst [vmem:[#allocation2 + $0x1a0] sm:$0xcc] %v1152
  %1188 = vst [vmem:[#allocation2 + $0x1a8] sm:$0xcc] %v1159
  %1189 = vst [vmem:[#allocation2 + $0x1b0] sm:$0xcc] %v1167
  %1190 = vst [vmem:[#allocation2 + $0x1b8] sm:$0xcc] %v1174
  %v1191 = vld [vmem:[%s0 + $0x1c] sm:$0xff]
  %v1192 = vld [vmem:[%s0 + $0x24] sm:$0xff]
  %v1193 = vld [vmem:[%s0 + $0x2c] sm:$0xff]
  %v1194 = vld [vmem:[%s0 + $0x34] sm:$0xff]
  %v1199 = vcombine.high %v1191, %v1191
  %v1201 = vunpack.c.l.s4 1983009808
  %v1202 = vunpack.c.0.s8 %v1201
  %v1203 = vlaneseq
  %v1204 = vshrl.u32 %v1203, 7
  %v1205 = vsub.s32 %v1202, %v1204
  %v1206 = vrot.slane %v1191, %v1205
  %v1208 = vunpack.c.l.s4 1983009808
  %v1209 = vunpack.c.0.s8 %v1208
  %v1210 = vlaneseq
  %v1211 = vshrl.u32 %v1210, 7
  %v1212 = vsub.s32 %v1209, %v1211
  %v1213 = vrot.slane %v1199, %v1212
  %v1214 = vcombine.high %v1192, %v1192
  %v1216 = vunpack.c.l.s4 1983009808
  %v1217 = vunpack.c.0.s8 %v1216
  %v1218 = vlaneseq
  %v1219 = vshrl.u32 %v1218, 7
  %v1220 = vsub.s32 %v1217, %v1219
  %v1221 = vrot.slane %v1192, %v1220
  %v1223 = vunpack.c.l.s4 1983009808
  %v1224 = vunpack.c.0.s8 %v1223
  %v1225 = vlaneseq
  %v1226 = vshrl.u32 %v1225, 7
  %v1227 = vsub.s32 %v1224, %v1226
  %v1228 = vrot.slane %v1214, %v1227
  %v1229 = vcombine.high %v1193, %v1193
  %v1231 = vunpack.c.l.s4 1983009808
  %v1232 = vunpack.c.0.s8 %v1231
  %v1233 = vlaneseq
  %v1234 = vshrl.u32 %v1233, 7
  %v1235 = vsub.s32 %v1232, %v1234
  %v1236 = vrot.slane %v1193, %v1235
  %v1238 = vunpack.c.l.s4 1983009808
  %v1239 = vunpack.c.0.s8 %v1238
  %v1240 = vlaneseq
  %v1241 = vshrl.u32 %v1240, 7
  %v1242 = vsub.s32 %v1239, %v1241
  %v1243 = vrot.slane %v1229, %v1242
  %v1244 = vcombine.high %v1194, %v1194
  %v1246 = vunpack.c.l.s4 1983009808
  %v1247 = vunpack.c.0.s8 %v1246
  %v1248 = vlaneseq
  %v1249 = vshrl.u32 %v1248, 7
  %v1250 = vsub.s32 %v1247, %v1249
  %v1251 = vrot.slane %v1194, %v1250
  %v1253 = vunpack.c.l.s4 1983009808
  %v1254 = vunpack.c.0.s8 %v1253
  %v1255 = vlaneseq
  %v1256 = vshrl.u32 %v1255, 7
  %v1257 = vsub.s32 %v1254, %v1256
  %v1258 = vrot.slane %v1244, %v1257
  %1267 = vst [vmem:[#allocation2 + $0x1c0] sm:$0x33] %v1206
  %1268 = vst [vmem:[#allocation2 + $0x1c8] sm:$0x33] %v1213
  %1269 = vst [vmem:[#allocation2 + $0x1d0] sm:$0x33] %v1221
  %1270 = vst [vmem:[#allocation2 + $0x1d8] sm:$0x33] %v1228
  %1271 = vst [vmem:[#allocation2 + $0x1e0] sm:$0x33] %v1236
  %1272 = vst [vmem:[#allocation2 + $0x1e8] sm:$0x33] %v1243
  %1273 = vst [vmem:[#allocation2 + $0x1f0] sm:$0x33] %v1251
  %1274 = vst [vmem:[#allocation2 + $0x1f8] sm:$0x33] %v1258
  %v1275 = vld [vmem:[%s0 + $0x1e] sm:$0xff]
  %v1276 = vld [vmem:[%s0 + $0x26] sm:$0xff]
  %v1277 = vld [vmem:[%s0 + $0x2e] sm:$0xff]
  %v1278 = vld [vmem:[%s0 + $0x36] sm:$0xff]
  %v1283 = vcombine.low %v1275, %v1275
  %v1285 = vunpack.c.l.s4 1983009808
  %v1286 = vunpack.c.0.s8 %v1285
  %v1287 = vlaneseq
  %v1288 = vshrl.u32 %v1287, 7
  %v1289 = vsub.s32 %v1286, %v1288
  %v1290 = vrot.slane %v1283, %v1289
  %v1292 = vunpack.c.l.s4 1983009808
  %v1293 = vunpack.c.0.s8 %v1292
  %v1294 = vlaneseq
  %v1295 = vshrl.u32 %v1294, 7
  %v1296 = vsub.s32 %v1293, %v1295
  %v1297 = vrot.slane %v1275, %v1296
  %v1298 = vcombine.low %v1276, %v1276
  %v1300 = vunpack.c.l.s4 1983009808
  %v1301 = vunpack.c.0.s8 %v1300
  %v1302 = vlaneseq
  %v1303 = vshrl.u32 %v1302, 7
  %v1304 = vsub.s32 %v1301, %v1303
  %v1305 = vrot.slane %v1298, %v1304
  %v1307 = vunpack.c.l.s4 1983009808
  %v1308 = vunpack.c.0.s8 %v1307
  %v1309 = vlaneseq
  %v1310 = vshrl.u32 %v1309, 7
  %v1311 = vsub.s32 %v1308, %v1310
  %v1312 = vrot.slane %v1276, %v1311
  %v1313 = vcombine.low %v1277, %v1277
  %v1315 = vunpack.c.l.s4 1983009808
  %v1316 = vunpack.c.0.s8 %v1315
  %v1317 = vlaneseq
  %v1318 = vshrl.u32 %v1317, 7
  %v1319 = vsub.s32 %v1316, %v1318
  %v1320 = vrot.slane %v1313, %v1319
  %v1322 = vunpack.c.l.s4 1983009808
  %v1323 = vunpack.c.0.s8 %v1322
  %v1324 = vlaneseq
  %v1325 = vshrl.u32 %v1324, 7
  %v1326 = vsub.s32 %v1323, %v1325
  %v1327 = vrot.slane %v1277, %v1326
  %v1328 = vcombine.low %v1278, %v1278
  %v1330 = vunpack.c.l.s4 1983009808
  %v1331 = vunpack.c.0.s8 %v1330
  %v1332 = vlaneseq
  %v1333 = vshrl.u32 %v1332, 7
  %v1334 = vsub.s32 %v1331, %v1333
  %v1335 = vrot.slane %v1328, %v1334
  %v1337 = vunpack.c.l.s4 1983009808
  %v1338 = vunpack.c.0.s8 %v1337
  %v1339 = vlaneseq
  %v1340 = vshrl.u32 %v1339, 7
  %v1341 = vsub.s32 %v1338, %v1340
  %v1342 = vrot.slane %v1278, %v1341
  %1351 = vst [vmem:[#allocation2 + $0x1c0] sm:$0xcc] %v1290
  %1352 = vst [vmem:[#allocation2 + $0x1c8] sm:$0xcc] %v1297
  %1353 = vst [vmem:[#allocation2 + $0x1d0] sm:$0xcc] %v1305
  %1354 = vst [vmem:[#allocation2 + $0x1d8] sm:$0xcc] %v1312
  %1355 = vst [vmem:[#allocation2 + $0x1e0] sm:$0xcc] %v1320
  %1356 = vst [vmem:[#allocation2 + $0x1e8] sm:$0xcc] %v1327
  %1357 = vst [vmem:[#allocation2 + $0x1f0] sm:$0xcc] %v1335
  %1358 = vst [vmem:[#allocation2 + $0x1f8] sm:$0xcc] %v1342
  %v1359 = vld [vmem:[%s0 + $0x20] sm:$0xff]
  %v1360 = vld [vmem:[%s0 + $0x28] sm:$0xff]
  %v1361 = vld [vmem:[%s0 + $0x30] sm:$0xff]
  %v1362 = vld [vmem:[%s0 + $0x38] sm:$0xff]
  %v1367 = vcombine.high %v1359, %v1359
  %v1369 = vunpack.c.l.s4 1983009808
  %v1370 = vunpack.c.0.s8 %v1369
  %v1371 = vlaneseq
  %v1372 = vshrl.u32 %v1371, 7
  %v1373 = vsub.s32 %v1370, %v1372
  %v1374 = vrot.slane %v1359, %v1373
  %v1376 = vunpack.c.l.s4 1983009808
  %v1377 = vunpack.c.0.s8 %v1376
  %v1378 = vlaneseq
  %v1379 = vshrl.u32 %v1378, 7
  %v1380 = vsub.s32 %v1377, %v1379
  %v1381 = vrot.slane %v1367, %v1380
  %v1382 = vcombine.high %v1360, %v1360
  %v1384 = vunpack.c.l.s4 1983009808
  %v1385 = vunpack.c.0.s8 %v1384
  %v1386 = vlaneseq
  %v1387 = vshrl.u32 %v1386, 7
  %v1388 = vsub.s32 %v1385, %v1387
  %v1389 = vrot.slane %v1360, %v1388
  %v1391 = vunpack.c.l.s4 1983009808
  %v1392 = vunpack.c.0.s8 %v1391
  %v1393 = vlaneseq
  %v1394 = vshrl.u32 %v1393, 7
  %v1395 = vsub.s32 %v1392, %v1394
  %v1396 = vrot.slane %v1382, %v1395
  %v1397 = vcombine.high %v1361, %v1361
  %v1399 = vunpack.c.l.s4 1983009808
  %v1400 = vunpack.c.0.s8 %v1399
  %v1401 = vlaneseq
  %v1402 = vshrl.u32 %v1401, 7
  %v1403 = vsub.s32 %v1400, %v1402
  %v1404 = vrot.slane %v1361, %v1403
  %v1406 = vunpack.c.l.s4 1983009808
  %v1407 = vunpack.c.0.s8 %v1406
  %v1408 = vlaneseq
  %v1409 = vshrl.u32 %v1408, 7
  %v1410 = vsub.s32 %v1407, %v1409
  %v1411 = vrot.slane %v1397, %v1410
  %v1412 = vcombine.high %v1362, %v1362
  %v1414 = vunpack.c.l.s4 1983009808
  %v1415 = vunpack.c.0.s8 %v1414
  %v1416 = vlaneseq
  %v1417 = vshrl.u32 %v1416, 7
  %v1418 = vsub.s32 %v1415, %v1417
  %v1419 = vrot.slane %v1362, %v1418
  %v1421 = vunpack.c.l.s4 1983009808
  %v1422 = vunpack.c.0.s8 %v1421
  %v1423 = vlaneseq
  %v1424 = vshrl.u32 %v1423, 7
  %v1425 = vsub.s32 %v1422, %v1424
  %v1426 = vrot.slane %v1412, %v1425
  %1435 = vst [vmem:[#allocation2 + $0x200] sm:$0x33] %v1374
  %1436 = vst [vmem:[#allocation2 + $0x208] sm:$0x33] %v1381
  %1437 = vst [vmem:[#allocation2 + $0x210] sm:$0x33] %v1389
  %1438 = vst [vmem:[#allocation2 + $0x218] sm:$0x33] %v1396
  %1439 = vst [vmem:[#allocation2 + $0x220] sm:$0x33] %v1404
  %1440 = vst [vmem:[#allocation2 + $0x228] sm:$0x33] %v1411
  %1441 = vst [vmem:[#allocation2 + $0x230] sm:$0x33] %v1419
  %1442 = vst [vmem:[#allocation2 + $0x238] sm:$0x33] %v1426
  %v1443 = vld [vmem:[%s0 + $0x22] sm:$0xff]
  %v1444 = vld [vmem:[%s0 + $0x2a] sm:$0xff]
  %v1445 = vld [vmem:[%s0 + $0x32] sm:$0xff]
  %v1446 = vld [vmem:[%s0 + $0x3a] sm:$0xff]
  %v1451 = vcombine.low %v1443, %v1443
  %v1453 = vunpack.c.l.s4 1983009808
  %v1454 = vunpack.c.0.s8 %v1453
  %v1455 = vlaneseq
  %v1456 = vshrl.u32 %v1455, 7
  %v1457 = vsub.s32 %v1454, %v1456
  %v1458 = vrot.slane %v1451, %v1457
  %v1460 = vunpack.c.l.s4 1983009808
  %v1461 = vunpack.c.0.s8 %v1460
  %v1462 = vlaneseq
  %v1463 = vshrl.u32 %v1462, 7
  %v1464 = vsub.s32 %v1461, %v1463
  %v1465 = vrot.slane %v1443, %v1464
  %v1466 = vcombine.low %v1444, %v1444
  %v1468 = vunpack.c.l.s4 1983009808
  %v1469 = vunpack.c.0.s8 %v1468
  %v1470 = vlaneseq
  %v1471 = vshrl.u32 %v1470, 7
  %v1472 = vsub.s32 %v1469, %v1471
  %v1473 = vrot.slane %v1466, %v1472
  %v1475 = vunpack.c.l.s4 1983009808
  %v1476 = vunpack.c.0.s8 %v1475
  %v1477 = vlaneseq
  %v1478 = vshrl.u32 %v1477, 7
  %v1479 = vsub.s32 %v1476, %v1478
  %v1480 = vrot.slane %v1444, %v1479
  %v1481 = vcombine.low %v1445, %v1445
  %v1483 = vunpack.c.l.s4 1983009808
  %v1484 = vunpack.c.0.s8 %v1483
  %v1485 = vlaneseq
  %v1486 = vshrl.u32 %v1485, 7
  %v1487 = vsub.s32 %v1484, %v1486
  %v1488 = vrot.slane %v1481, %v1487
  %v1490 = vunpack.c.l.s4 1983009808
  %v1491 = vunpack.c.0.s8 %v1490
  %v1492 = vlaneseq
  %v1493 = vshrl.u32 %v1492, 7
  %v1494 = vsub.s32 %v1491, %v1493
  %v1495 = vrot.slane %v1445, %v1494
  %v1496 = vcombine.low %v1446, %v1446
  %v1498 = vunpack.c.l.s4 1983009808
  %v1499 = vunpack.c.0.s8 %v1498
  %v1500 = vlaneseq
  %v1501 = vshrl.u32 %v1500, 7
  %v1502 = vsub.s32 %v1499, %v1501
  %v1503 = vrot.slane %v1496, %v1502
  %v1505 = vunpack.c.l.s4 1983009808
  %v1506 = vunpack.c.0.s8 %v1505
  %v1507 = vlaneseq
  %v1508 = vshrl.u32 %v1507, 7
  %v1509 = vsub.s32 %v1506, %v1508
  %v1510 = vrot.slane %v1446, %v1509
  %1519 = vst [vmem:[#allocation2 + $0x200] sm:$0xcc] %v1458
  %1520 = vst [vmem:[#allocation2 + $0x208] sm:$0xcc] %v1465
  %1521 = vst [vmem:[#allocation2 + $0x210] sm:$0xcc] %v1473
  %1522 = vst [vmem:[#allocation2 + $0x218] sm:$0xcc] %v1480
  %1523 = vst [vmem:[#allocation2 + $0x220] sm:$0xcc] %v1488
  %1524 = vst [vmem:[#allocation2 + $0x228] sm:$0xcc] %v1495
  %1525 = vst [vmem:[#allocation2 + $0x230] sm:$0xcc] %v1503
  %1526 = vst [vmem:[#allocation2 + $0x238] sm:$0xcc] %v1510
  %v1527 = vld [vmem:[%s0 + $0x24] sm:$0xff]
  %v1528 = vld [vmem:[%s0 + $0x2c] sm:$0xff]
  %v1529 = vld [vmem:[%s0 + $0x34] sm:$0xff]
  %v1530 = vld [vmem:[%s0 + $0x3c] sm:$0xff]
  %v1535 = vcombine.high %v1527, %v1527
  %v1537 = vunpack.c.l.s4 1983009808
  %v1538 = vunpack.c.0.s8 %v1537
  %v1539 = vlaneseq
  %v1540 = vshrl.u32 %v1539, 7
  %v1541 = vsub.s32 %v1538, %v1540
  %v1542 = vrot.slane %v1527, %v1541
  %v1544 = vunpack.c.l.s4 1983009808
  %v1545 = vunpack.c.0.s8 %v1544
  %v1546 = vlaneseq
  %v1547 = vshrl.u32 %v1546, 7
  %v1548 = vsub.s32 %v1545, %v1547
  %v1549 = vrot.slane %v1535, %v1548
  %v1550 = vcombine.high %v1528, %v1528
  %v1552 = vunpack.c.l.s4 1983009808
  %v1553 = vunpack.c.0.s8 %v1552
  %v1554 = vlaneseq
  %v1555 = vshrl.u32 %v1554, 7
  %v1556 = vsub.s32 %v1553, %v1555
  %v1557 = vrot.slane %v1528, %v1556
  %v1559 = vunpack.c.l.s4 1983009808
  %v1560 = vunpack.c.0.s8 %v1559
  %v1561 = vlaneseq
  %v1562 = vshrl.u32 %v1561, 7
  %v1563 = vsub.s32 %v1560, %v1562
  %v1564 = vrot.slane %v1550, %v1563
  %v1565 = vcombine.high %v1529, %v1529
  %v1567 = vunpack.c.l.s4 1983009808
  %v1568 = vunpack.c.0.s8 %v1567
  %v1569 = vlaneseq
  %v1570 = vshrl.u32 %v1569, 7
  %v1571 = vsub.s32 %v1568, %v1570
  %v1572 = vrot.slane %v1529, %v1571
  %v1574 = vunpack.c.l.s4 1983009808
  %v1575 = vunpack.c.0.s8 %v1574
  %v1576 = vlaneseq
  %v1577 = vshrl.u32 %v1576, 7
  %v1578 = vsub.s32 %v1575, %v1577
  %v1579 = vrot.slane %v1565, %v1578
  %v1580 = vcombine.high %v1530, %v1530
  %v1582 = vunpack.c.l.s4 1983009808
  %v1583 = vunpack.c.0.s8 %v1582
  %v1584 = vlaneseq
  %v1585 = vshrl.u32 %v1584, 7
  %v1586 = vsub.s32 %v1583, %v1585
  %v1587 = vrot.slane %v1530, %v1586
  %v1589 = vunpack.c.l.s4 1983009808
  %v1590 = vunpack.c.0.s8 %v1589
  %v1591 = vlaneseq
  %v1592 = vshrl.u32 %v1591, 7
  %v1593 = vsub.s32 %v1590, %v1592
  %v1594 = vrot.slane %v1580, %v1593
  %1603 = vst [vmem:[#allocation2 + $0x240] sm:$0x33] %v1542
  %1604 = vst [vmem:[#allocation2 + $0x248] sm:$0x33] %v1549
  %1605 = vst [vmem:[#allocation2 + $0x250] sm:$0x33] %v1557
  %1606 = vst [vmem:[#allocation2 + $0x258] sm:$0x33] %v1564
  %1607 = vst [vmem:[#allocation2 + $0x260] sm:$0x33] %v1572
  %1608 = vst [vmem:[#allocation2 + $0x268] sm:$0x33] %v1579
  %1609 = vst [vmem:[#allocation2 + $0x270] sm:$0x33] %v1587
  %1610 = vst [vmem:[#allocation2 + $0x278] sm:$0x33] %v1594
  %v1611 = vld [vmem:[%s0 + $0x26] sm:$0xff]
  %v1612 = vld [vmem:[%s0 + $0x2e] sm:$0xff]
  %v1613 = vld [vmem:[%s0 + $0x36] sm:$0xff]
  %v1614 = vld [vmem:[%s0 + $0x3e] sm:$0xff]
  %v1619 = vcombine.low %v1611, %v1611
  %v1621 = vunpack.c.l.s4 1983009808
  %v1622 = vunpack.c.0.s8 %v1621
  %v1623 = vlaneseq
  %v1624 = vshrl.u32 %v1623, 7
  %v1625 = vsub.s32 %v1622, %v1624
  %v1626 = vrot.slane %v1619, %v1625
  %v1628 = vunpack.c.l.s4 1983009808
  %v1629 = vunpack.c.0.s8 %v1628
  %v1630 = vlaneseq
  %v1631 = vshrl.u32 %v1630, 7
  %v1632 = vsub.s32 %v1629, %v1631
  %v1633 = vrot.slane %v1611, %v1632
  %v1634 = vcombine.low %v1612, %v1612
  %v1636 = vunpack.c.l.s4 1983009808
  %v1637 = vunpack.c.0.s8 %v1636
  %v1638 = vlaneseq
  %v1639 = vshrl.u32 %v1638, 7
  %v1640 = vsub.s32 %v1637, %v1639
  %v1641 = vrot.slane %v1634, %v1640
  %v1643 = vunpack.c.l.s4 1983009808
  %v1644 = vunpack.c.0.s8 %v1643
  %v1645 = vlaneseq
  %v1646 = vshrl.u32 %v1645, 7
  %v1647 = vsub.s32 %v1644, %v1646
  %v1648 = vrot.slane %v1612, %v1647
  %v1649 = vcombine.low %v1613, %v1613
  %v1651 = vunpack.c.l.s4 1983009808
  %v1652 = vunpack.c.0.s8 %v1651
  %v1653 = vlaneseq
  %v1654 = vshrl.u32 %v1653, 7
  %v1655 = vsub.s32 %v1652, %v1654
  %v1656 = vrot.slane %v1649, %v1655
  %v1658 = vunpack.c.l.s4 1983009808
  %v1659 = vunpack.c.0.s8 %v1658
  %v1660 = vlaneseq
  %v1661 = vshrl.u32 %v1660, 7
  %v1662 = vsub.s32 %v1659, %v1661
  %v1663 = vrot.slane %v1613, %v1662
  %v1664 = vcombine.low %v1614, %v1614
  %v1666 = vunpack.c.l.s4 1983009808
  %v1667 = vunpack.c.0.s8 %v1666
  %v1668 = vlaneseq
  %v1669 = vshrl.u32 %v1668, 7
  %v1670 = vsub.s32 %v1667, %v1669
  %v1671 = vrot.slane %v1664, %v1670
  %v1673 = vunpack.c.l.s4 1983009808
  %v1674 = vunpack.c.0.s8 %v1673
  %v1675 = vlaneseq
  %v1676 = vshrl.u32 %v1675, 7
  %v1677 = vsub.s32 %v1674, %v1676
  %v1678 = vrot.slane %v1614, %v1677
  %1687 = vst [vmem:[#allocation2 + $0x240] sm:$0xcc] %v1626
  %1688 = vst [vmem:[#allocation2 + $0x248] sm:$0xcc] %v1633
  %1689 = vst [vmem:[#allocation2 + $0x250] sm:$0xcc] %v1641
  %1690 = vst [vmem:[#allocation2 + $0x258] sm:$0xcc] %v1648
  %1691 = vst [vmem:[#allocation2 + $0x260] sm:$0xcc] %v1656
  %1692 = vst [vmem:[#allocation2 + $0x268] sm:$0xcc] %v1663
  %1693 = vst [vmem:[#allocation2 + $0x270] sm:$0xcc] %v1671
  %1694 = vst [vmem:[#allocation2 + $0x278] sm:$0xcc] %v1678
  %v1695 = vld [vmem:[%s0 + $0x28] sm:$0xff]
  %v1696 = vld [vmem:[%s0 + $0x30] sm:$0xff]
  %v1697 = vld [vmem:[%s0 + $0x38] sm:$0xff]
  %v1698 = vld [vmem:[%s0 + $0x40] sm:$0xff]
  %v1703 = vcombine.high %v1695, %v1695
  %v1705 = vunpack.c.l.s4 1983009808
  %v1706 = vunpack.c.0.s8 %v1705
  %v1707 = vlaneseq
  %v1708 = vshrl.u32 %v1707, 7
  %v1709 = vsub.s32 %v1706, %v1708
  %v1710 = vrot.slane %v1695, %v1709
  %v1712 = vunpack.c.l.s4 1983009808
  %v1713 = vunpack.c.0.s8 %v1712
  %v1714 = vlaneseq
  %v1715 = vshrl.u32 %v1714, 7
  %v1716 = vsub.s32 %v1713, %v1715
  %v1717 = vrot.slane %v1703, %v1716
  %v1718 = vcombine.high %v1696, %v1696
  %v1720 = vunpack.c.l.s4 1983009808
  %v1721 = vunpack.c.0.s8 %v1720
  %v1722 = vlaneseq
  %v1723 = vshrl.u32 %v1722, 7
  %v1724 = vsub.s32 %v1721, %v1723
  %v1725 = vrot.slane %v1696, %v1724
  %v1727 = vunpack.c.l.s4 1983009808
  %v1728 = vunpack.c.0.s8 %v1727
  %v1729 = vlaneseq
  %v1730 = vshrl.u32 %v1729, 7
  %v1731 = vsub.s32 %v1728, %v1730
  %v1732 = vrot.slane %v1718, %v1731
  %v1733 = vcombine.high %v1697, %v1697
  %v1735 = vunpack.c.l.s4 1983009808
  %v1736 = vunpack.c.0.s8 %v1735
  %v1737 = vlaneseq
  %v1738 = vshrl.u32 %v1737, 7
  %v1739 = vsub.s32 %v1736, %v1738
  %v1740 = vrot.slane %v1697, %v1739
  %v1742 = vunpack.c.l.s4 1983009808
  %v1743 = vunpack.c.0.s8 %v1742
  %v1744 = vlaneseq
  %v1745 = vshrl.u32 %v1744, 7
  %v1746 = vsub.s32 %v1743, %v1745
  %v1747 = vrot.slane %v1733, %v1746
  %v1748 = vcombine.high %v1698, %v1698
  %v1750 = vunpack.c.l.s4 1983009808
  %v1751 = vunpack.c.0.s8 %v1750
  %v1752 = vlaneseq
  %v1753 = vshrl.u32 %v1752, 7
  %v1754 = vsub.s32 %v1751, %v1753
  %v1755 = vrot.slane %v1698, %v1754
  %v1757 = vunpack.c.l.s4 1983009808
  %v1758 = vunpack.c.0.s8 %v1757
  %v1759 = vlaneseq
  %v1760 = vshrl.u32 %v1759, 7
  %v1761 = vsub.s32 %v1758, %v1760
  %v1762 = vrot.slane %v1748, %v1761
  %1771 = vst [vmem:[#allocation2 + $0x280] sm:$0x33] %v1710
  %1772 = vst [vmem:[#allocation2 + $0x288] sm:$0x33] %v1717
  %1773 = vst [vmem:[#allocation2 + $0x290] sm:$0x33] %v1725
  %1774 = vst [vmem:[#allocation2 + $0x298] sm:$0x33] %v1732
  %1775 = vst [vmem:[#allocation2 + $0x2a0] sm:$0x33] %v1740
  %1776 = vst [vmem:[#allocation2 + $0x2a8] sm:$0x33] %v1747
  %1777 = vst [vmem:[#allocation2 + $0x2b0] sm:$0x33] %v1755
  %1778 = vst [vmem:[#allocation2 + $0x2b8] sm:$0x33] %v1762
  %v1779 = vld [vmem:[%s0 + $0x2a] sm:$0xff]
  %v1780 = vld [vmem:[%s0 + $0x32] sm:$0xff]
  %v1781 = vld [vmem:[%s0 + $0x3a] sm:$0xff]
  %v1782 = vld [vmem:[%s0 + $0x42] sm:$0xff]
  %v1787 = vcombine.low %v1779, %v1779
  %v1789 = vunpack.c.l.s4 1983009808
  %v1790 = vunpack.c.0.s8 %v1789
  %v1791 = vlaneseq
  %v1792 = vshrl.u32 %v1791, 7
  %v1793 = vsub.s32 %v1790, %v1792
  %v1794 = vrot.slane %v1787, %v1793
  %v1796 = vunpack.c.l.s4 1983009808
  %v1797 = vunpack.c.0.s8 %v1796
  %v1798 = vlaneseq
  %v1799 = vshrl.u32 %v1798, 7
  %v1800 = vsub.s32 %v1797, %v1799
  %v1801 = vrot.slane %v1779, %v1800
  %v1802 = vcombine.low %v1780, %v1780
  %v1804 = vunpack.c.l.s4 1983009808
  %v1805 = vunpack.c.0.s8 %v1804
  %v1806 = vlaneseq
  %v1807 = vshrl.u32 %v1806, 7
  %v1808 = vsub.s32 %v1805, %v1807
  %v1809 = vrot.slane %v1802, %v1808
  %v1811 = vunpack.c.l.s4 1983009808
  %v1812 = vunpack.c.0.s8 %v1811
  %v1813 = vlaneseq
  %v1814 = vshrl.u32 %v1813, 7
  %v1815 = vsub.s32 %v1812, %v1814
  %v1816 = vrot.slane %v1780, %v1815
  %v1817 = vcombine.low %v1781, %v1781
  %v1819 = vunpack.c.l.s4 1983009808
  %v1820 = vunpack.c.0.s8 %v1819
  %v1821 = vlaneseq
  %v1822 = vshrl.u32 %v1821, 7
  %v1823 = vsub.s32 %v1820, %v1822
  %v1824 = vrot.slane %v1817, %v1823
  %v1826 = vunpack.c.l.s4 1983009808
  %v1827 = vunpack.c.0.s8 %v1826
  %v1828 = vlaneseq
  %v1829 = vshrl.u32 %v1828, 7
  %v1830 = vsub.s32 %v1827, %v1829
  %v1831 = vrot.slane %v1781, %v1830
  %v1832 = vcombine.low %v1782, %v1782
  %v1834 = vunpack.c.l.s4 1983009808
  %v1835 = vunpack.c.0.s8 %v1834
  %v1836 = vlaneseq
  %v1837 = vshrl.u32 %v1836, 7
  %v1838 = vsub.s32 %v1835, %v1837
  %v1839 = vrot.slane %v1832, %v1838
  %v1841 = vunpack.c.l.s4 1983009808
  %v1842 = vunpack.c.0.s8 %v1841
  %v1843 = vlaneseq
  %v1844 = vshrl.u32 %v1843, 7
  %v1845 = vsub.s32 %v1842, %v1844
  %v1846 = vrot.slane %v1782, %v1845
  %1855 = vst [vmem:[#allocation2 + $0x280] sm:$0xcc] %v1794
  %1856 = vst [vmem:[#allocation2 + $0x288] sm:$0xcc] %v1801
  %1857 = vst [vmem:[#allocation2 + $0x290] sm:$0xcc] %v1809
  %1858 = vst [vmem:[#allocation2 + $0x298] sm:$0xcc] %v1816
  %1859 = vst [vmem:[#allocation2 + $0x2a0] sm:$0xcc] %v1824
  %1860 = vst [vmem:[#allocation2 + $0x2a8] sm:$0xcc] %v1831
  %1861 = vst [vmem:[#allocation2 + $0x2b0] sm:$0xcc] %v1839
  %1862 = vst [vmem:[#allocation2 + $0x2b8] sm:$0xcc] %v1846
  %v1863 = vld [vmem:[%s0 + $0x2c] sm:$0xff]
  %v1864 = vld [vmem:[%s0 + $0x34] sm:$0xff]
  %v1865 = vld [vmem:[%s0 + $0x3c] sm:$0xff]
  %v1866 = vld [vmem:[%s0 + $0x44] sm:$0xff]
  %v1871 = vcombine.high %v1863, %v1863
  %v1873 = vunpack.c.l.s4 1983009808
  %v1874 = vunpack.c.0.s8 %v1873
  %v1875 = vlaneseq
  %v1876 = vshrl.u32 %v1875, 7
  %v1877 = vsub.s32 %v1874, %v1876
  %v1878 = vrot.slane %v1863, %v1877
  %v1880 = vunpack.c.l.s4 1983009808
  %v1881 = vunpack.c.0.s8 %v1880
  %v1882 = vlaneseq
  %v1883 = vshrl.u32 %v1882, 7
  %v1884 = vsub.s32 %v1881, %v1883
  %v1885 = vrot.slane %v1871, %v1884
  %v1886 = vcombine.high %v1864, %v1864
  %v1888 = vunpack.c.l.s4 1983009808
  %v1889 = vunpack.c.0.s8 %v1888
  %v1890 = vlaneseq
  %v1891 = vshrl.u32 %v1890, 7
  %v1892 = vsub.s32 %v1889, %v1891
  %v1893 = vrot.slane %v1864, %v1892
  %v1895 = vunpack.c.l.s4 1983009808
  %v1896 = vunpack.c.0.s8 %v1895
  %v1897 = vlaneseq
  %v1898 = vshrl.u32 %v1897, 7
  %v1899 = vsub.s32 %v1896, %v1898
  %v1900 = vrot.slane %v1886, %v1899
  %v1901 = vcombine.high %v1865, %v1865
  %v1903 = vunpack.c.l.s4 1983009808
  %v1904 = vunpack.c.0.s8 %v1903
  %v1905 = vlaneseq
  %v1906 = vshrl.u32 %v1905, 7
  %v1907 = vsub.s32 %v1904, %v1906
  %v1908 = vrot.slane %v1865, %v1907
  %v1910 = vunpack.c.l.s4 1983009808
  %v1911 = vunpack.c.0.s8 %v1910
  %v1912 = vlaneseq
  %v1913 = vshrl.u32 %v1912, 7
  %v1914 = vsub.s32 %v1911, %v1913
  %v1915 = vrot.slane %v1901, %v1914
  %v1916 = vcombine.high %v1866, %v1866
  %v1918 = vunpack.c.l.s4 1983009808
  %v1919 = vunpack.c.0.s8 %v1918
  %v1920 = vlaneseq
  %v1921 = vshrl.u32 %v1920, 7
  %v1922 = vsub.s32 %v1919, %v1921
  %v1923 = vrot.slane %v1866, %v1922
  %v1925 = vunpack.c.l.s4 1983009808
  %v1926 = vunpack.c.0.s8 %v1925
  %v1927 = vlaneseq
  %v1928 = vshrl.u32 %v1927, 7
  %v1929 = vsub.s32 %v1926, %v1928
  %v1930 = vrot.slane %v1916, %v1929
  %1939 = vst [vmem:[#allocation2 + $0x2c0] sm:$0x33] %v1878
  %1940 = vst [vmem:[#allocation2 + $0x2c8] sm:$0x33] %v1885
  %1941 = vst [vmem:[#allocation2 + $0x2d0] sm:$0x33] %v1893
  %1942 = vst [vmem:[#allocation2 + $0x2d8] sm:$0x33] %v1900
  %1943 = vst [vmem:[#allocation2 + $0x2e0] sm:$0x33] %v1908
  %1944 = vst [vmem:[#allocation2 + $0x2e8] sm:$0x33] %v1915
  %1945 = vst [vmem:[#allocation2 + $0x2f0] sm:$0x33] %v1923
  %1946 = vst [vmem:[#allocation2 + $0x2f8] sm:$0x33] %v1930
  %v1947 = vld [vmem:[%s0 + $0x2e] sm:$0xff]
  %v1948 = vld [vmem:[%s0 + $0x36] sm:$0xff]
  %v1949 = vld [vmem:[%s0 + $0x3e] sm:$0xff]
  %v1950 = vld [vmem:[%s0 + $0x46] sm:$0xff]
  %v1955 = vcombine.low %v1947, %v1947
  %v1957 = vunpack.c.l.s4 1983009808
  %v1958 = vunpack.c.0.s8 %v1957
  %v1959 = vlaneseq
  %v1960 = vshrl.u32 %v1959, 7
  %v1961 = vsub.s32 %v1958, %v1960
  %v1962 = vrot.slane %v1955, %v1961
  %v1964 = vunpack.c.l.s4 1983009808
  %v1965 = vunpack.c.0.s8 %v1964
  %v1966 = vlaneseq
  %v1967 = vshrl.u32 %v1966, 7
  %v1968 = vsub.s32 %v1965, %v1967
  %v1969 = vrot.slane %v1947, %v1968
  %v1970 = vcombine.low %v1948, %v1948
  %v1972 = vunpack.c.l.s4 1983009808
  %v1973 = vunpack.c.0.s8 %v1972
  %v1974 = vlaneseq
  %v1975 = vshrl.u32 %v1974, 7
  %v1976 = vsub.s32 %v1973, %v1975
  %v1977 = vrot.slane %v1970, %v1976
  %v1979 = vunpack.c.l.s4 1983009808
  %v1980 = vunpack.c.0.s8 %v1979
  %v1981 = vlaneseq
  %v1982 = vshrl.u32 %v1981, 7
  %v1983 = vsub.s32 %v1980, %v1982
  %v1984 = vrot.slane %v1948, %v1983
  %v1985 = vcombine.low %v1949, %v1949
  %v1987 = vunpack.c.l.s4 1983009808
  %v1988 = vunpack.c.0.s8 %v1987
  %v1989 = vlaneseq
  %v1990 = vshrl.u32 %v1989, 7
  %v1991 = vsub.s32 %v1988, %v1990
  %v1992 = vrot.slane %v1985, %v1991
  %v1994 = vunpack.c.l.s4 1983009808
  %v1995 = vunpack.c.0.s8 %v1994
  %v1996 = vlaneseq
  %v1997 = vshrl.u32 %v1996, 7
  %v1998 = vsub.s32 %v1995, %v1997
  %v1999 = vrot.slane %v1949, %v1998
  %v2000 = vcombine.low %v1950, %v1950
  %v2002 = vunpack.c.l.s4 1983009808
  %v2003 = vunpack.c.0.s8 %v2002
  %v2004 = vlaneseq
  %v2005 = vshrl.u32 %v2004, 7
  %v2006 = vsub.s32 %v2003, %v2005
  %v2007 = vrot.slane %v2000, %v2006
  %v2009 = vunpack.c.l.s4 1983009808
  %v2010 = vunpack.c.0.s8 %v2009
  %v2011 = vlaneseq
  %v2012 = vshrl.u32 %v2011, 7
  %v2013 = vsub.s32 %v2010, %v2012
  %v2014 = vrot.slane %v1950, %v2013
  %2023 = vst [vmem:[#allocation2 + $0x2c0] sm:$0xcc] %v1962
  %2024 = vst [vmem:[#allocation2 + $0x2c8] sm:$0xcc] %v1969
  %2025 = vst [vmem:[#allocation2 + $0x2d0] sm:$0xcc] %v1977
  %2026 = vst [vmem:[#allocation2 + $0x2d8] sm:$0xcc] %v1984
  %2027 = vst [vmem:[#allocation2 + $0x2e0] sm:$0xcc] %v1992
  %2028 = vst [vmem:[#allocation2 + $0x2e8] sm:$0xcc] %v1999
  %2029 = vst [vmem:[#allocation2 + $0x2f0] sm:$0xcc] %v2007
  %2030 = vst [vmem:[#allocation2 + $0x2f8] sm:$0xcc] %v2014
  %v2031 = vld [vmem:[%s1] sm:$0xf]
  %v2032 = vld [vmem:[%s1 + $0x4] sm:$0xf]
  %v2033 = vld [vmem:[#allocation2] sm:$0xff]
  %v2034 = vld [vmem:[#allocation2 + $0x8] sm:$0xff]
  %v2035 = vld [vmem:[#allocation2 + $0x10] sm:$0xff]
  %v2036 = vld [vmem:[#allocation2 + $0x18] sm:$0xff]
  %v2037 = vld [vmem:[#allocation2 + $0x20] sm:$0xff]
  %v2038 = vld [vmem:[#allocation2 + $0x28] sm:$0xff]
  %v2039 = vld [vmem:[#allocation2 + $0x30] sm:$0xff]
  %v2040 = vld [vmem:[#allocation2 + $0x38] sm:$0xff]
  %v2041 = vld [vmem:[#allocation2 + $0x40] sm:$0xff]
  %v2042 = vld [vmem:[#allocation2 + $0x48] sm:$0xff]
  %v2043 = vld [vmem:[#allocation2 + $0x50] sm:$0xff]
  %v2044 = vld [vmem:[#allocation2 + $0x58] sm:$0xff]
  %v2045 = vld [vmem:[#allocation2 + $0x60] sm:$0xff]
  %v2046 = vld [vmem:[#allocation2 + $0x68] sm:$0xff]
  %v2047 = vld [vmem:[#allocation2 + $0x70] sm:$0xff]
  %v2048 = vld [vmem:[#allocation2 + $0x78] sm:$0xff]
  %v2049 = vld [vmem:[#allocation2 + $0x80] sm:$0xff]
  %v2050 = vld [vmem:[#allocation2 + $0x88] sm:$0xff]
  %v2051 = vld [vmem:[#allocation2 + $0x90] sm:$0xff]
  %v2052 = vld [vmem:[#allocation2 + $0x98] sm:$0xff]
  %v2053 = vld [vmem:[#allocation2 + $0xa0] sm:$0xff]
  %v2054 = vld [vmem:[#allocation2 + $0xa8] sm:$0xff]
  %v2055 = vld [vmem:[#allocation2 + $0xb0] sm:$0xff]
  %v2056 = vld [vmem:[#allocation2 + $0xb8] sm:$0xff]
  %v2057 = vld [vmem:[#allocation2 + $0xc0] sm:$0xff]
  %v2058 = vld [vmem:[#allocation2 + $0xc8] sm:$0xff]
  %v2059 = vld [vmem:[#allocation2 + $0xd0] sm:$0xff]
  %v2060 = vld [vmem:[#allocation2 + $0xd8] sm:$0xff]
  %v2061 = vld [vmem:[#allocation2 + $0xe0] sm:$0xff]
  %v2062 = vld [vmem:[#allocation2 + $0xe8] sm:$0xff]
  %v2063 = vld [vmem:[#allocation2 + $0xf0] sm:$0xff]
  %v2064 = vld [vmem:[#allocation2 + $0xf8] sm:$0xff]
  %v2065 = vld [vmem:[#allocation2 + $0x100] sm:$0xff]
  %v2066 = vld [vmem:[#allocation2 + $0x108] sm:$0xff]
  %v2067 = vld [vmem:[#allocation2 + $0x110] sm:$0xff]
  %v2068 = vld [vmem:[#allocation2 + $0x118] sm:$0xff]
  %v2069 = vld [vmem:[#allocation2 + $0x120] sm:$0xff]
  %v2070 = vld [vmem:[#allocation2 + $0x128] sm:$0xff]
  %v2071 = vld [vmem:[#allocation2 + $0x130] sm:$0xff]
  %v2072 = vld [vmem:[#allocation2 + $0x138] sm:$0xff]
  %v2073 = vld [vmem:[#allocation2 + $0x140] sm:$0xff]
  %v2074 = vld [vmem:[#allocation2 + $0x148] sm:$0xff]
  %v2075 = vld [vmem:[#allocation2 + $0x150] sm:$0xff]
  %v2076 = vld [vmem:[#allocation2 + $0x158] sm:$0xff]
  %v2077 = vld [vmem:[#allocation2 + $0x160] sm:$0xff]
  %v2078 = vld [vmem:[#allocation2 + $0x168] sm:$0xff]
  %v2079 = vld [vmem:[#allocation2 + $0x170] sm:$0xff]
  %v2080 = vld [vmem:[#allocation2 + $0x178] sm:$0xff]
  %v2081 = vld [vmem:[#allocation2 + $0x180] sm:$0xff]
  %v2082 = vld [vmem:[#allocation2 + $0x188] sm:$0xff]
  %v2083 = vld [vmem:[#allocation2 + $0x190] sm:$0xff]
  %v2084 = vld [vmem:[#allocation2 + $0x198] sm:$0xff]
  %v2085 = vld [vmem:[#allocation2 + $0x1a0] sm:$0xff]
  %v2086 = vld [vmem:[#allocation2 + $0x1a8] sm:$0xff]
  %v2087 = vld [vmem:[#allocation2 + $0x1b0] sm:$0xff]
  %v2088 = vld [vmem:[#allocation2 + $0x1b8] sm:$0xff]
  %v2089 = vld [vmem:[#allocation2 + $0x1c0] sm:$0xff]
  %v2090 = vld [vmem:[#allocation2 + $0x1c8] sm:$0xff]
  %v2091 = vld [vmem:[#allocation2 + $0x1d0] sm:$0xff]
  %v2092 = vld [vmem:[#allocation2 + $0x1d8] sm:$0xff]
  %v2093 = vld [vmem:[#allocation2 + $0x1e0] sm:$0xff]
  %v2094 = vld [vmem:[#allocation2 + $0x1e8] sm:$0xff]
  %v2095 = vld [vmem:[#allocation2 + $0x1f0] sm:$0xff]
  %v2096 = vld [vmem:[#allocation2 + $0x1f8] sm:$0xff]
  %v2097 = vld [vmem:[#allocation2 + $0x200] sm:$0xff]
  %v2098 = vld [vmem:[#allocation2 + $0x208] sm:$0xff]
  %v2099 = vld [vmem:[#allocation2 + $0x210] sm:$0xff]
  %v2100 = vld [vmem:[#allocation2 + $0x218] sm:$0xff]
  %v2101 = vld [vmem:[#allocation2 + $0x220] sm:$0xff]
  %v2102 = vld [vmem:[#allocation2 + $0x228] sm:$0xff]
  %v2103 = vld [vmem:[#allocation2 + $0x230] sm:$0xff]
  %v2104 = vld [vmem:[#allocation2 + $0x238] sm:$0xff]
  %v2105 = vld [vmem:[#allocation2 + $0x240] sm:$0xff]
  %v2106 = vld [vmem:[#allocation2 + $0x248] sm:$0xff]
  %v2107 = vld [vmem:[#allocation2 + $0x250] sm:$0xff]
  %v2108 = vld [vmem:[#allocation2 + $0x258] sm:$0xff]
  %v2109 = vld [vmem:[#allocation2 + $0x260] sm:$0xff]
  %v2110 = vld [vmem:[#allocation2 + $0x268] sm:$0xff]
  %v2111 = vld [vmem:[#allocation2 + $0x270] sm:$0xff]
  %v2112 = vld [vmem:[#allocation2 + $0x278] sm:$0xff]
  %v2113 = vld [vmem:[#allocation2 + $0x280] sm:$0xff]
  %v2114 = vld [vmem:[#allocation2 + $0x288] sm:$0xff]
  %v2115 = vld [vmem:[#allocation2 + $0x290] sm:$0xff]
  %v2116 = vld [vmem:[#allocation2 + $0x298] sm:$0xff]
  %v2117 = vld [vmem:[#allocation2 + $0x2a0] sm:$0xff]
  %v2118 = vld [vmem:[#allocation2 + $0x2a8] sm:$0xff]
  %v2119 = vld [vmem:[#allocation2 + $0x2b0] sm:$0xff]
  %v2120 = vld [vmem:[#allocation2 + $0x2b8] sm:$0xff]
  %v2121 = vld [vmem:[#allocation2 + $0x2c0] sm:$0xff]
  %v2122 = vld [vmem:[#allocation2 + $0x2c8] sm:$0xff]
  %v2123 = vld [vmem:[#allocation2 + $0x2d0] sm:$0xff]
  %v2124 = vld [vmem:[#allocation2 + $0x2d8] sm:$0xff]
  %v2125 = vld [vmem:[#allocation2 + $0x2e0] sm:$0xff]
  %v2126 = vld [vmem:[#allocation2 + $0x2e8] sm:$0xff]
  %v2127 = vld [vmem:[#allocation2 + $0x2f0] sm:$0xff]
  %v2128 = vld [vmem:[#allocation2 + $0x2f8] sm:$0xff]
  %v2129 = vld [vmem:[%s2] sm:$0xff]
  %v2130 = vld [vmem:[%s2 + $0x8] sm:$0xff]
  %2132 = vset.pattern.permute.xlu0 0
  %2133 = vperm.xlu0 %2132, %v2129
  %v2134 = vpop.permute.xlu0 %2133
  %2137 = vset.pattern.permute.xlu0 0
  %2138 = vperm.xlu0 %2137, %v2130
  %v2139 = vpop.permute.xlu0 %2138
  %v2143 = vunpack.c.l.b16 %v2031
  %v2144 = vunpack.c.l.b16 %v2032
  %v2145 = vpack.c.b16 %v2144, %v2143
  %v2242 = vunpack.c.l.b16 %v2033
  %v2243 = vunpack.c.h.b16 %v2033
  %v2244 = vunpack.c.l.b16 %v2034
  %v2245 = vunpack.c.h.b16 %v2034
  %v2246 = vunpack.c.l.b16 %v2035
  %v2247 = vunpack.c.h.b16 %v2035
  %v2248 = vunpack.c.l.b16 %v2036
  %v2249 = vunpack.c.h.b16 %v2036
  %v2250 = vunpack.c.l.b16 %v2037
  %v2251 = vunpack.c.h.b16 %v2037
  %v2252 = vunpack.c.l.b16 %v2038
  %v2253 = vunpack.c.h.b16 %v2038
  %v2254 = vunpack.c.l.b16 %v2039
  %v2255 = vunpack.c.h.b16 %v2039
  %v2256 = vunpack.c.l.b16 %v2040
  %v2257 = vunpack.c.h.b16 %v2040
  %v2258 = vunpack.c.l.b16 %v2041
  %v2259 = vunpack.c.h.b16 %v2041
  %v2260 = vunpack.c.l.b16 %v2042
  %v2261 = vunpack.c.h.b16 %v2042
  %v2262 = vunpack.c.l.b16 %v2043
  %v2263 = vunpack.c.h.b16 %v2043
  %v2264 = vunpack.c.l.b16 %v2044
  %v2265 = vunpack.c.h.b16 %v2044
  %v2266 = vunpack.c.l.b16 %v2045
  %v2267 = vunpack.c.h.b16 %v2045
  %v2268 = vunpack.c.l.b16 %v2046
  %v2269 = vunpack.c.h.b16 %v2046
  %v2270 = vunpack.c.l.b16 %v2047
  %v2271 = vunpack.c.h.b16 %v2047
  %v2272 = vunpack.c.l.b16 %v2048
  %v2273 = vunpack.c.h.b16 %v2048
  %v2274 = vunpack.c.l.b16 %v2049
  %v2275 = vunpack.c.h.b16 %v2049
  %v2276 = vunpack.c.l.b16 %v2050
  %v2277 = vunpack.c.h.b16 %v2050
  %v2278 = vunpack.c.l.b16 %v2051
  %v2279 = vunpack.c.h.b16 %v2051
  %v2280 = vunpack.c.l.b16 %v2052
  %v2281 = vunpack.c.h.b16 %v2052
  %v2282 = vunpack.c.l.b16 %v2053
  %v2283 = vunpack.c.h.b16 %v2053
  %v2284 = vunpack.c.l.b16 %v2054
  %v2285 = vunpack.c.h.b16 %v2054
  %v2286 = vunpack.c.l.b16 %v2055
  %v2287 = vunpack.c.h.b16 %v2055
  %v2288 = vunpack.c.l.b16 %v2056
  %v2289 = vunpack.c.h.b16 %v2056
  %v2290 = vunpack.c.l.b16 %v2057
  %v2291 = vunpack.c.h.b16 %v2057
  %v2292 = vunpack.c.l.b16 %v2058
  %v2293 = vunpack.c.h.b16 %v2058
  %v2294 = vunpack.c.l.b16 %v2059
  %v2295 = vunpack.c.h.b16 %v2059
  %v2296 = vunpack.c.l.b16 %v2060
  %v2297 = vunpack.c.h.b16 %v2060
  %v2298 = vunpack.c.l.b16 %v2061
  %v2299 = vunpack.c.h.b16 %v2061
  %v2300 = vunpack.c.l.b16 %v2062
  %v2301 = vunpack.c.h.b16 %v2062
  %v2302 = vunpack.c.l.b16 %v2063
  %v2303 = vunpack.c.h.b16 %v2063
  %v2304 = vunpack.c.l.b16 %v2064
  %v2305 = vunpack.c.h.b16 %v2064
  %v2306 = vunpack.c.l.b16 %v2065
  %v2307 = vunpack.c.h.b16 %v2065
  %v2308 = vunpack.c.l.b16 %v2066
  %v2309 = vunpack.c.h.b16 %v2066
  %v2310 = vunpack.c.l.b16 %v2067
  %v2311 = vunpack.c.h.b16 %v2067
  %v2312 = vunpack.c.l.b16 %v2068
  %v2313 = vunpack.c.h.b16 %v2068
  %v2314 = vunpack.c.l.b16 %v2069
  %v2315 = vunpack.c.h.b16 %v2069
  %v2316 = vunpack.c.l.b16 %v2070
  %v2317 = vunpack.c.h.b16 %v2070
  %v2318 = vunpack.c.l.b16 %v2071
  %v2319 = vunpack.c.h.b16 %v2071
  %v2320 = vunpack.c.l.b16 %v2072
  %v2321 = vunpack.c.h.b16 %v2072
  %v2322 = vunpack.c.l.b16 %v2073
  %v2323 = vunpack.c.h.b16 %v2073
  %v2324 = vunpack.c.l.b16 %v2074
  %v2325 = vunpack.c.h.b16 %v2074
  %v2326 = vunpack.c.l.b16 %v2075
  %v2327 = vunpack.c.h.b16 %v2075
  %v2328 = vunpack.c.l.b16 %v2076
  %v2329 = vunpack.c.h.b16 %v2076
  %v2330 = vunpack.c.l.b16 %v2077
  %v2331 = vunpack.c.h.b16 %v2077
  %v2332 = vunpack.c.l.b16 %v2078
  %v2333 = vunpack.c.h.b16 %v2078
  %v2334 = vunpack.c.l.b16 %v2079
  %v2335 = vunpack.c.h.b16 %v2079
  %v2336 = vunpack.c.l.b16 %v2080
  %v2337 = vunpack.c.h.b16 %v2080
  %v2338 = vunpack.c.l.b16 %v2081
  %v2339 = vunpack.c.h.b16 %v2081
  %v2340 = vunpack.c.l.b16 %v2082
  %v2341 = vunpack.c.h.b16 %v2082
  %v2342 = vunpack.c.l.b16 %v2083
  %v2343 = vunpack.c.h.b16 %v2083
  %v2344 = vunpack.c.l.b16 %v2084
  %v2345 = vunpack.c.h.b16 %v2084
  %v2346 = vunpack.c.l.b16 %v2085
  %v2347 = vunpack.c.h.b16 %v2085
  %v2348 = vunpack.c.l.b16 %v2086
  %v2349 = vunpack.c.h.b16 %v2086
  %v2350 = vunpack.c.l.b16 %v2087
  %v2351 = vunpack.c.h.b16 %v2087
  %v2352 = vunpack.c.l.b16 %v2088
  %v2353 = vunpack.c.h.b16 %v2088
  %v2354 = vunpack.c.l.b16 %v2089
  %v2355 = vunpack.c.h.b16 %v2089
  %v2356 = vunpack.c.l.b16 %v2090
  %v2357 = vunpack.c.h.b16 %v2090
  %v2358 = vunpack.c.l.b16 %v2091
  %v2359 = vunpack.c.h.b16 %v2091
  %v2360 = vunpack.c.l.b16 %v2092
  %v2361 = vunpack.c.h.b16 %v2092
  %v2362 = vunpack.c.l.b16 %v2093
  %v2363 = vunpack.c.h.b16 %v2093
  %v2364 = vunpack.c.l.b16 %v2094
  %v2365 = vunpack.c.h.b16 %v2094
  %v2366 = vunpack.c.l.b16 %v2095
  %v2367 = vunpack.c.h.b16 %v2095
  %v2368 = vunpack.c.l.b16 %v2096
  %v2369 = vunpack.c.h.b16 %v2096
  %v2370 = vunpack.c.l.b16 %v2097
  %v2371 = vunpack.c.h.b16 %v2097
  %v2372 = vunpack.c.l.b16 %v2098
  %v2373 = vunpack.c.h.b16 %v2098
  %v2374 = vunpack.c.l.b16 %v2099
  %v2375 = vunpack.c.h.b16 %v2099
  %v2376 = vunpack.c.l.b16 %v2100
  %v2377 = vunpack.c.h.b16 %v2100
  %v2378 = vunpack.c.l.b16 %v2101
  %v2379 = vunpack.c.h.b16 %v2101
  %v2380 = vunpack.c.l.b16 %v2102
  %v2381 = vunpack.c.h.b16 %v2102
  %v2382 = vunpack.c.l.b16 %v2103
  %v2383 = vunpack.c.h.b16 %v2103
  %v2384 = vunpack.c.l.b16 %v2104
  %v2385 = vunpack.c.h.b16 %v2104
  %v2386 = vunpack.c.l.b16 %v2105
  %v2387 = vunpack.c.h.b16 %v2105
  %v2388 = vunpack.c.l.b16 %v2106
  %v2389 = vunpack.c.h.b16 %v2106
  %v2390 = vunpack.c.l.b16 %v2107
  %v2391 = vunpack.c.h.b16 %v2107
  %v2392 = vunpack.c.l.b16 %v2108
  %v2393 = vunpack.c.h.b16 %v2108
  %v2394 = vunpack.c.l.b16 %v2109
  %v2395 = vunpack.c.h.b16 %v2109
  %v2396 = vunpack.c.l.b16 %v2110
  %v2397 = vunpack.c.h.b16 %v2110
  %v2398 = vunpack.c.l.b16 %v2111
  %v2399 = vunpack.c.h.b16 %v2111
  %v2400 = vunpack.c.l.b16 %v2112
  %v2401 = vunpack.c.h.b16 %v2112
  %v2402 = vunpack.c.l.b16 %v2113
  %v2403 = vunpack.c.h.b16 %v2113
  %v2404 = vunpack.c.l.b16 %v2114
  %v2405 = vunpack.c.h.b16 %v2114
  %v2406 = vunpack.c.l.b16 %v2115
  %v2407 = vunpack.c.h.b16 %v2115
  %v2408 = vunpack.c.l.b16 %v2116
  %v2409 = vunpack.c.h.b16 %v2116
  %v2410 = vunpack.c.l.b16 %v2117
  %v2411 = vunpack.c.h.b16 %v2117
  %v2412 = vunpack.c.l.b16 %v2118
  %v2413 = vunpack.c.h.b16 %v2118
  %v2414 = vunpack.c.l.b16 %v2119
  %v2415 = vunpack.c.h.b16 %v2119
  %v2416 = vunpack.c.l.b16 %v2120
  %v2417 = vunpack.c.h.b16 %v2120
  %v2418 = vunpack.c.l.b16 %v2121
  %v2419 = vunpack.c.h.b16 %v2121
  %v2420 = vunpack.c.l.b16 %v2122
  %v2421 = vunpack.c.h.b16 %v2122
  %v2422 = vunpack.c.l.b16 %v2123
  %v2423 = vunpack.c.h.b16 %v2123
  %v2424 = vunpack.c.l.b16 %v2124
  %v2425 = vunpack.c.h.b16 %v2124
  %v2426 = vunpack.c.l.b16 %v2125
  %v2427 = vunpack.c.h.b16 %v2125
  %v2428 = vunpack.c.l.b16 %v2126
  %v2429 = vunpack.c.h.b16 %v2126
  %v2430 = vunpack.c.l.b16 %v2127
  %v2431 = vunpack.c.h.b16 %v2127
  %v2432 = vunpack.c.l.b16 %v2128
  %v2433 = vunpack.c.h.b16 %v2128
  %v2434 = vpack.c.b16 %v2258, %v2242
  %v2435 = vpack.c.b16 %v2259, %v2243
  %v2436 = vpack.c.b16 %v2260, %v2244
  %v2437 = vpack.c.b16 %v2261, %v2245
  %v2438 = vpack.c.b16 %v2262, %v2246
  %v2439 = vpack.c.b16 %v2263, %v2247
  %v2440 = vpack.c.b16 %v2264, %v2248
  %v2441 = vpack.c.b16 %v2265, %v2249
  %v2442 = vpack.c.b16 %v2266, %v2250
  %v2443 = vpack.c.b16 %v2267, %v2251
  %v2444 = vpack.c.b16 %v2268, %v2252
  %v2445 = vpack.c.b16 %v2269, %v2253
  %v2446 = vpack.c.b16 %v2270, %v2254
  %v2447 = vpack.c.b16 %v2271, %v2255
  %v2448 = vpack.c.b16 %v2272, %v2256
  %v2449 = vpack.c.b16 %v2273, %v2257
  %v2450 = vpack.c.b16 %v2290, %v2274
  %v2451 = vpack.c.b16 %v2291, %v2275
  %v2452 = vpack.c.b16 %v2292, %v2276
  %v2453 = vpack.c.b16 %v2293, %v2277
  %v2454 = vpack.c.b16 %v2294, %v2278
  %v2455 = vpack.c.b16 %v2295, %v2279
  %v2456 = vpack.c.b16 %v2296, %v2280
  %v2457 = vpack.c.b16 %v2297, %v2281
  %v2458 = vpack.c.b16 %v2298, %v2282
  %v2459 = vpack.c.b16 %v2299, %v2283
  %v2460 = vpack.c.b16 %v2300, %v2284
  %v2461 = vpack.c.b16 %v2301, %v2285
  %v2462 = vpack.c.b16 %v2302, %v2286
  %v2463 = vpack.c.b16 %v2303, %v2287
  %v2464 = vpack.c.b16 %v2304, %v2288
  %v2465 = vpack.c.b16 %v2305, %v2289
  %v2466 = vpack.c.b16 %v2322, %v2306
  %v2467 = vpack.c.b16 %v2323, %v2307
  %v2468 = vpack.c.b16 %v2324, %v2308
  %v2469 = vpack.c.b16 %v2325, %v2309
  %v2470 = vpack.c.b16 %v2326, %v2310
  %v2471 = vpack.c.b16 %v2327, %v2311
  %v2472 = vpack.c.b16 %v2328, %v2312
  %v2473 = vpack.c.b16 %v2329, %v2313
  %v2474 = vpack.c.b16 %v2330, %v2314
  %v2475 = vpack.c.b16 %v2331, %v2315
  %v2476 = vpack.c.b16 %v2332, %v2316
  %v2477 = vpack.c.b16 %v2333, %v2317
  %v2478 = vpack.c.b16 %v2334, %v2318
  %v2479 = vpack.c.b16 %v2335, %v2319
  %v2480 = vpack.c.b16 %v2336, %v2320
  %v2481 = vpack.c.b16 %v2337, %v2321
  %v2482 = vpack.c.b16 %v2354, %v2338
  %v2483 = vpack.c.b16 %v2355, %v2339
  %v2484 = vpack.c.b16 %v2356, %v2340
  %v2485 = vpack.c.b16 %v2357, %v2341
  %v2486 = vpack.c.b16 %v2358, %v2342
  %v2487 = vpack.c.b16 %v2359, %v2343
  %v2488 = vpack.c.b16 %v2360, %v2344
  %v2489 = vpack.c.b16 %v2361, %v2345
  %v2490 = vpack.c.b16 %v2362, %v2346
  %v2491 = vpack.c.b16 %v2363, %v2347
  %v2492 = vpack.c.b16 %v2364, %v2348
  %v2493 = vpack.c.b16 %v2365, %v2349
  %v2494 = vpack.c.b16 %v2366, %v2350
  %v2495 = vpack.c.b16 %v2367, %v2351
  %v2496 = vpack.c.b16 %v2368, %v2352
  %v2497 = vpack.c.b16 %v2369, %v2353
  %v2498 = vpack.c.b16 %v2386, %v2370
  %v2499 = vpack.c.b16 %v2387, %v2371
  %v2500 = vpack.c.b16 %v2388, %v2372
  %v2501 = vpack.c.b16 %v2389, %v2373
  %v2502 = vpack.c.b16 %v2390, %v2374
  %v2503 = vpack.c.b16 %v2391, %v2375
  %v2504 = vpack.c.b16 %v2392, %v2376
  %v2505 = vpack.c.b16 %v2393, %v2377
  %v2506 = vpack.c.b16 %v2394, %v2378
  %v2507 = vpack.c.b16 %v2395, %v2379
  %v2508 = vpack.c.b16 %v2396, %v2380
  %v2509 = vpack.c.b16 %v2397, %v2381
  %v2510 = vpack.c.b16 %v2398, %v2382
  %v2511 = vpack.c.b16 %v2399, %v2383
  %v2512 = vpack.c.b16 %v2400, %v2384
  %v2513 = vpack.c.b16 %v2401, %v2385
  %v2514 = vpack.c.b16 %v2418, %v2402
  %v2515 = vpack.c.b16 %v2419, %v2403
  %v2516 = vpack.c.b16 %v2420, %v2404
  %v2517 = vpack.c.b16 %v2421, %v2405
  %v2518 = vpack.c.b16 %v2422, %v2406
  %v2519 = vpack.c.b16 %v2423, %v2407
  %v2520 = vpack.c.b16 %v2424, %v2408
  %v2521 = vpack.c.b16 %v2425, %v2409
  %v2522 = vpack.c.b16 %v2426, %v2410
  %v2523 = vpack.c.b16 %v2427, %v2411
  %v2524 = vpack.c.b16 %v2428, %v2412
  %v2525 = vpack.c.b16 %v2429, %v2413
  %v2526 = vpack.c.b16 %v2430, %v2414
  %v2527 = vpack.c.b16 %v2431, %v2415
  %v2528 = vpack.c.b16 %v2432, %v2416
  %v2529 = vpack.c.b16 %v2433, %v2417
  %vm2626 = vcmask 785408
  %v2628 = vsel %vm2626, %v2145, 0
  %2630 = vmatprep.subr.bf16.mxu0 0
  %2631 = vmatpush1.bf16.msra.mxu0 0
  %2632 = vmatprep.subr.bf16.mxu0 0
  %2633 = vmatpush1.bf16.msra.mxu0 0
  %2634 = vmatprep.subr.bf16.mxu0 %v2515
  %2635 = vmatpush1.bf16.msra.mxu0 %v2514
  %2636 = vmatprep.subr.bf16.mxu0 %v2499
  %2637 = vmatpush1.bf16.msra.mxu0 %v2498
  %2638 = vmatprep.subr.bf16.mxu0 %v2483
  %2639 = vmatpush1.bf16.msra.mxu0 %v2482
  %2640 = vmatprep.subr.bf16.mxu0 %v2467
  %2641 = vmatpush1.bf16.msra.mxu0 %v2466
  %2642 = vmatprep.subr.bf16.mxu0 %v2451
  %2643 = vmatpush1.bf16.msra.mxu0 %v2450
  %2644 = vmatprep.subr.bf16.mxu0 %v2435
  %2645 = vmatpush1.bf16.msra.mxu0 %v2434
  %2646 = vmatprep.subr.bf16.mxu0 0
  %2647 = vmatpush2.bf16.msra.mxu0 0
  %2648 = vmatprep.subr.bf16.mxu0 0
  %2649 = vmatpush2.bf16.msra.mxu0 0
  %2650 = vmatprep.subr.bf16.mxu0 0
  %2651 = vmatpush2.bf16.msra.mxu0 0
  %2652 = vmatprep.subr.bf16.mxu0 0
  %2653 = vmatpush2.bf16.msra.mxu0 0
  %2654 = vmatprep.subr.bf16.mxu0 0
  %2655 = vmatpush2.bf16.msra.mxu0 0
  %2656 = vmatprep.subr.bf16.mxu0 0
  %2657 = vmatpush2.bf16.msra.mxu0 0
  %2658 = vmatprep.subr.bf16.mxu0 0
  %2659 = vmatpush2.bf16.msra.mxu0 0
  %2660 = vmatprep.subr.bf16.mxu0 0
  %2661 = vmatpush2.bf16.msra.mxu0 0
  %2662 = vmatprep.mubr.bf16.mxu0 0
  %2663 = vmatmul.mubr.bf16.gmra.mxu0 %v2628
  %v2664 = vpop.f32.mrf.mxu0
  %v2665 = vadd.f32 %v2134, %v2664
  %v2666 = vpop.f32.mrf.mxu0
  %v2667 = vadd.f32 %v2134, %v2666
  %v2668 = vpop.f32.mrf.mxu0
  %v2669 = vadd.f32 %v2139, %v2668
  %v2670 = vpop.f32.mrf.mxu0
  %v2671 = vadd.f32 %v2139, %v2670
  %2672 = vdwg.mxu0
  %2673 = vmatprep.subr.bf16.mxu0 0
  %2674 = vmatpush1.bf16.msra.mxu0 0
  %2675 = vmatprep.subr.bf16.mxu0 0
  %2676 = vmatpush1.bf16.msra.mxu0 0
  %2677 = vmatprep.subr.bf16.mxu0 %v2517
  %2678 = vmatpush1.bf16.msra.mxu0 %v2516
  %2679 = vmatprep.subr.bf16.mxu0 %v2501
  %2680 = vmatpush1.bf16.msra.mxu0 %v2500
  %2681 = vmatprep.subr.bf16.mxu0 %v2485
  %2682 = vmatpush1.bf16.msra.mxu0 %v2484
  %2683 = vmatprep.subr.bf16.mxu0 %v2469
  %2684 = vmatpush1.bf16.msra.mxu0 %v2468
  %2685 = vmatprep.subr.bf16.mxu0 %v2453
  %2686 = vmatpush1.bf16.msra.mxu0 %v2452
  %2687 = vmatprep.subr.bf16.mxu0 %v2437
  %2688 = vmatpush1.bf16.msra.mxu0 %v2436
  %2689 = vmatprep.subr.bf16.mxu0 0
  %2690 = vmatpush2.bf16.msra.mxu0 0
  %2691 = vmatprep.subr.bf16.mxu0 0
  %2692 = vmatpush2.bf16.msra.mxu0 0
  %2693 = vmatprep.subr.bf16.mxu0 0
  %2694 = vmatpush2.bf16.msra.mxu0 0
  %2695 = vmatprep.subr.bf16.mxu0 0
  %2696 = vmatpush2.bf16.msra.mxu0 0
  %2697 = vmatprep.subr.bf16.mxu0 0
  %2698 = vmatpush2.bf16.msra.mxu0 0
  %2699 = vmatprep.subr.bf16.mxu0 0
  %2700 = vmatpush2.bf16.msra.mxu0 0
  %2701 = vmatprep.subr.bf16.mxu0 0
  %2702 = vmatpush2.bf16.msra.mxu0 0
  %2703 = vmatprep.subr.bf16.mxu0 0
  %2704 = vmatpush2.bf16.msra.mxu0 0
  %2705 = vmatprep.mubr.bf16.mxu0 0
  %2706 = vmatmul.mubr.bf16.gmra.mxu0 %v2628
  %v2707 = vpop.f32.mrf.mxu0
  %v2708 = vadd.f32 %v2134, %v2707
  %v2709 = vpop.f32.mrf.mxu0
  %v2710 = vadd.f32 %v2134, %v2709
  %v2711 = vpop.f32.mrf.mxu0
  %v2712 = vadd.f32 %v2139, %v2711
  %v2713 = vpop.f32.mrf.mxu0
  %v2714 = vadd.f32 %v2139, %v2713
  %2715 = vdwg.mxu0
  %2716 = vmatprep.subr.bf16.mxu0 0
  %2717 = vmatpush1.bf16.msra.mxu0 0
  %2718 = vmatprep.subr.bf16.mxu0 0
  %2719 = vmatpush1.bf16.msra.mxu0 0
  %2720 = vmatprep.subr.bf16.mxu0 %v2519
  %2721 = vmatpush1.bf16.msra.mxu0 %v2518
  %2722 = vmatprep.subr.bf16.mxu0 %v2503
  %2723 = vmatpush1.bf16.msra.mxu0 %v2502
  %2724 = vmatprep.subr.bf16.mxu0 %v2487
  %2725 = vmatpush1.bf16.msra.mxu0 %v2486
  %2726 = vmatprep.subr.bf16.mxu0 %v2471
  %2727 = vmatpush1.bf16.msra.mxu0 %v2470
  %2728 = vmatprep.subr.bf16.mxu0 %v2455
  %2729 = vmatpush1.bf16.msra.mxu0 %v2454
  %2730 = vmatprep.subr.bf16.mxu0 %v2439
  %2731 = vmatpush1.bf16.msra.mxu0 %v2438
  %2732 = vmatprep.subr.bf16.mxu0 0
  %2733 = vmatpush2.bf16.msra.mxu0 0
  %2734 = vmatprep.subr.bf16.mxu0 0
  %2735 = vmatpush2.bf16.msra.mxu0 0
  %2736 = vmatprep.subr.bf16.mxu0 0
  %2737 = vmatpush2.bf16.msra.mxu0 0
  %2738 = vmatprep.subr.bf16.mxu0 0
  %2739 = vmatpush2.bf16.msra.mxu0 0
  %2740 = vmatprep.subr.bf16.mxu0 0
  %2741 = vmatpush2.bf16.msra.mxu0 0
  %2742 = vmatprep.subr.bf16.mxu0 0
  %2743 = vmatpush2.bf16.msra.mxu0 0
  %2744 = vmatprep.subr.bf16.mxu0 0
  %2745 = vmatpush2.bf16.msra.mxu0 0
  %2746 = vmatprep.subr.bf16.mxu0 0
  %2747 = vmatpush2.bf16.msra.mxu0 0
  %2748 = vmatprep.mubr.bf16.mxu0 0
  %2749 = vmatmul.mubr.bf16.gmra.mxu0 %v2628
  %v2750 = vpop.f32.mrf.mxu0
  %v2751 = vadd.f32 %v2134, %v2750
  %v2752 = vpop.f32.mrf.mxu0
  %v2753 = vadd.f32 %v2134, %v2752
  %v2754 = vpop.f32.mrf.mxu0
  %v2755 = vadd.f32 %v2139, %v2754
  %v2756 = vpop.f32.mrf.mxu0
  %v2757 = vadd.f32 %v2139, %v2756
  %2758 = vdwg.mxu0
  %2759 = vmatprep.subr.bf16.mxu0 0
  %2760 = vmatpush1.bf16.msra.mxu0 0
  %2761 = vmatprep.subr.bf16.mxu0 0
  %2762 = vmatpush1.bf16.msra.mxu0 0
  %2763 = vmatprep.subr.bf16.mxu0 %v2521
  %2764 = vmatpush1.bf16.msra.mxu0 %v2520
  %2765 = vmatprep.subr.bf16.mxu0 %v2505
  %2766 = vmatpush1.bf16.msra.mxu0 %v2504
  %2767 = vmatprep.subr.bf16.mxu0 %v2489
  %2768 = vmatpush1.bf16.msra.mxu0 %v2488
  %2769 = vmatprep.subr.bf16.mxu0 %v2473
  %2770 = vmatpush1.bf16.msra.mxu0 %v2472
  %2771 = vmatprep.subr.bf16.mxu0 %v2457
  %2772 = vmatpush1.bf16.msra.mxu0 %v2456
  %2773 = vmatprep.subr.bf16.mxu0 %v2441
  %2774 = vmatpush1.bf16.msra.mxu0 %v2440
  %2775 = vmatprep.subr.bf16.mxu0 0
  %2776 = vmatpush2.bf16.msra.mxu0 0
  %2777 = vmatprep.subr.bf16.mxu0 0
  %2778 = vmatpush2.bf16.msra.mxu0 0
  %2779 = vmatprep.subr.bf16.mxu0 0
  %2780 = vmatpush2.bf16.msra.mxu0 0
  %2781 = vmatprep.subr.bf16.mxu0 0
  %2782 = vmatpush2.bf16.msra.mxu0 0
  %2783 = vmatprep.subr.bf16.mxu0 0
  %2784 = vmatpush2.bf16.msra.mxu0 0
  %2785 = vmatprep.subr.bf16.mxu0 0
  %2786 = vmatpush2.bf16.msra.mxu0 0
  %2787 = vmatprep.subr.bf16.mxu0 0
  %2788 = vmatpush2.bf16.msra.mxu0 0
  %2789 = vmatprep.subr.bf16.mxu0 0
  %2790 = vmatpush2.bf16.msra.mxu0 0
  %2791 = vmatprep.mubr.bf16.mxu0 0
  %2792 = vmatmul.mubr.bf16.gmra.mxu0 %v2628
  %v2793 = vpop.f32.mrf.mxu0
  %v2794 = vadd.f32 %v2134, %v2793
  %v2795 = vpop.f32.mrf.mxu0
  %v2796 = vadd.f32 %v2134, %v2795
  %v2797 = vpop.f32.mrf.mxu0
  %v2798 = vadd.f32 %v2139, %v2797
  %v2799 = vpop.f32.mrf.mxu0
  %v2800 = vadd.f32 %v2139, %v2799
  %2801 = vdwg.mxu0
  %2802 = vmatprep.subr.bf16.mxu0 0
  %2803 = vmatpush1.bf16.msra.mxu0 0
  %2804 = vmatprep.subr.bf16.mxu0 0
  %2805 = vmatpush1.bf16.msra.mxu0 0
  %2806 = vmatprep.subr.bf16.mxu0 %v2523
  %2807 = vmatpush1.bf16.msra.mxu0 %v2522
  %2808 = vmatprep.subr.bf16.mxu0 %v2507
  %2809 = vmatpush1.bf16.msra.mxu0 %v2506
  %2810 = vmatprep.subr.bf16.mxu0 %v2491
  %2811 = vmatpush1.bf16.msra.mxu0 %v2490
  %2812 = vmatprep.subr.bf16.mxu0 %v2475
  %2813 = vmatpush1.bf16.msra.mxu0 %v2474
  %2814 = vmatprep.subr.bf16.mxu0 %v2459
  %2815 = vmatpush1.bf16.msra.mxu0 %v2458
  %2816 = vmatprep.subr.bf16.mxu0 %v2443
  %2817 = vmatpush1.bf16.msra.mxu0 %v2442
  %2818 = vmatprep.subr.bf16.mxu0 0
  %2819 = vmatpush2.bf16.msra.mxu0 0
  %2820 = vmatprep.subr.bf16.mxu0 0
  %2821 = vmatpush2.bf16.msra.mxu0 0
  %2822 = vmatprep.subr.bf16.mxu0 0
  %2823 = vmatpush2.bf16.msra.mxu0 0
  %2824 = vmatprep.subr.bf16.mxu0 0
  %2825 = vmatpush2.bf16.msra.mxu0 0
  %2826 = vmatprep.subr.bf16.mxu0 0
  %2827 = vmatpush2.bf16.msra.mxu0 0
  %2828 = vmatprep.subr.bf16.mxu0 0
  %2829 = vmatpush2.bf16.msra.mxu0 0
  %2830 = vmatprep.subr.bf16.mxu0 0
  %2831 = vmatpush2.bf16.msra.mxu0 0
  %2832 = vmatprep.subr.bf16.mxu0 0
  %2833 = vmatpush2.bf16.msra.mxu0 0
  %2834 = vmatprep.mubr.bf16.mxu0 0
  %2835 = vmatmul.mubr.bf16.gmra.mxu0 %v2628
  %v2836 = vpop.f32.mrf.mxu0
  %v2837 = vadd.f32 %v2134, %v2836
  %v2838 = vpop.f32.mrf.mxu0
  %v2839 = vadd.f32 %v2134, %v2838
  %v2840 = vpop.f32.mrf.mxu0
  %v2841 = vadd.f32 %v2139, %v2840
  %v2842 = vpop.f32.mrf.mxu0
  %v2843 = vadd.f32 %v2139, %v2842
  %2844 = vdwg.mxu0
  %2845 = vmatprep.subr.bf16.mxu0 0
  %2846 = vmatpush1.bf16.msra.mxu0 0
  %2847 = vmatprep.subr.bf16.mxu0 0
  %2848 = vmatpush1.bf16.msra.mxu0 0
  %2849 = vmatprep.subr.bf16.mxu0 %v2525
  %2850 = vmatpush1.bf16.msra.mxu0 %v2524
  %2851 = vmatprep.subr.bf16.mxu0 %v2509
  %2852 = vmatpush1.bf16.msra.mxu0 %v2508
  %2853 = vmatprep.subr.bf16.mxu0 %v2493
  %2854 = vmatpush1.bf16.msra.mxu0 %v2492
  %2855 = vmatprep.subr.bf16.mxu0 %v2477
  %2856 = vmatpush1.bf16.msra.mxu0 %v2476
  %2857 = vmatprep.subr.bf16.mxu0 %v2461
  %2858 = vmatpush1.bf16.msra.mxu0 %v2460
  %2859 = vmatprep.subr.bf16.mxu0 %v2445
  %2860 = vmatpush1.bf16.msra.mxu0 %v2444
  %2861 = vmatprep.subr.bf16.mxu0 0
  %2862 = vmatpush2.bf16.msra.mxu0 0
  %2863 = vmatprep.subr.bf16.mxu0 0
  %2864 = vmatpush2.bf16.msra.mxu0 0
  %2865 = vmatprep.subr.bf16.mxu0 0
  %2866 = vmatpush2.bf16.msra.mxu0 0
  %2867 = vmatprep.subr.bf16.mxu0 0
  %2868 = vmatpush2.bf16.msra.mxu0 0
  %2869 = vmatprep.subr.bf16.mxu0 0
  %2870 = vmatpush2.bf16.msra.mxu0 0
  %2871 = vmatprep.subr.bf16.mxu0 0
  %2872 = vmatpush2.bf16.msra.mxu0 0
  %2873 = vmatprep.subr.bf16.mxu0 0
  %2874 = vmatpush2.bf16.msra.mxu0 0
  %2875 = vmatprep.subr.bf16.mxu0 0
  %2876 = vmatpush2.bf16.msra.mxu0 0
  %2877 = vmatprep.mubr.bf16.mxu0 0
  %2878 = vmatmul.mubr.bf16.gmra.mxu0 %v2628
  %v2879 = vpop.f32.mrf.mxu0
  %v2880 = vadd.f32 %v2134, %v2879
  %v2881 = vpop.f32.mrf.mxu0
  %v2882 = vadd.f32 %v2134, %v2881
  %v2883 = vpop.f32.mrf.mxu0
  %v2884 = vadd.f32 %v2139, %v2883
  %v2885 = vpop.f32.mrf.mxu0
  %v2886 = vadd.f32 %v2139, %v2885
  %2887 = vdwg.mxu0
  %2888 = vmatprep.subr.bf16.mxu0 0
  %2889 = vmatpush1.bf16.msra.mxu0 0
  %2890 = vmatprep.subr.bf16.mxu0 0
  %2891 = vmatpush1.bf16.msra.mxu0 0
  %2892 = vmatprep.subr.bf16.mxu0 %v2527
  %2893 = vmatpush1.bf16.msra.mxu0 %v2526
  %2894 = vmatprep.subr.bf16.mxu0 %v2511
  %2895 = vmatpush1.bf16.msra.mxu0 %v2510
  %2896 = vmatprep.subr.bf16.mxu0 %v2495
  %2897 = vmatpush1.bf16.msra.mxu0 %v2494
  %2898 = vmatprep.subr.bf16.mxu0 %v2479
  %2899 = vmatpush1.bf16.msra.mxu0 %v2478
  %2900 = vmatprep.subr.bf16.mxu0 %v2463
  %2901 = vmatpush1.bf16.msra.mxu0 %v2462
  %2902 = vmatprep.subr.bf16.mxu0 %v2447
  %2903 = vmatpush1.bf16.msra.mxu0 %v2446
  %2904 = vmatprep.subr.bf16.mxu0 0
  %2905 = vmatpush2.bf16.msra.mxu0 0
  %2906 = vmatprep.subr.bf16.mxu0 0
  %2907 = vmatpush2.bf16.msra.mxu0 0
  %2908 = vmatprep.subr.bf16.mxu0 0
  %2909 = vmatpush2.bf16.msra.mxu0 0
  %2910 = vmatprep.subr.bf16.mxu0 0
  %2911 = vmatpush2.bf16.msra.mxu0 0
  %2912 = vmatprep.subr.bf16.mxu0 0
  %2913 = vmatpush2.bf16.msra.mxu0 0
  %2914 = vmatprep.subr.bf16.mxu0 0
  %2915 = vmatpush2.bf16.msra.mxu0 0
  %2916 = vmatprep.subr.bf16.mxu0 0
  %2917 = vmatpush2.bf16.msra.mxu0 0
  %2918 = vmatprep.subr.bf16.mxu0 0
  %2919 = vmatpush2.bf16.msra.mxu0 0
  %2920 = vmatprep.mubr.bf16.mxu0 0
  %2921 = vmatmul.mubr.bf16.gmra.mxu0 %v2628
  %v2922 = vpop.f32.mrf.mxu0
  %v2923 = vadd.f32 %v2134, %v2922
  %v2924 = vpop.f32.mrf.mxu0
  %v2925 = vadd.f32 %v2134, %v2924
  %v2926 = vpop.f32.mrf.mxu0
  %v2927 = vadd.f32 %v2139, %v2926
  %v2928 = vpop.f32.mrf.mxu0
  %v2929 = vadd.f32 %v2139, %v2928
  %2930 = vdwg.mxu0
  %2931 = vmatprep.subr.bf16.mxu0 0
  %2932 = vmatpush1.bf16.msra.mxu0 0
  %2933 = vmatprep.subr.bf16.mxu0 0
  %2934 = vmatpush1.bf16.msra.mxu0 0
  %2935 = vmatprep.subr.bf16.mxu0 %v2529
  %2936 = vmatpush1.bf16.msra.mxu0 %v2528
  %2937 = vmatprep.subr.bf16.mxu0 %v2513
  %2938 = vmatpush1.bf16.msra.mxu0 %v2512
  %2939 = vmatprep.subr.bf16.mxu0 %v2497
  %2940 = vmatpush1.bf16.msra.mxu0 %v2496
  %2941 = vmatprep.subr.bf16.mxu0 %v2481
  %2942 = vmatpush1.bf16.msra.mxu0 %v2480
  %2943 = vmatprep.subr.bf16.mxu0 %v2465
  %2944 = vmatpush1.bf16.msra.mxu0 %v2464
  %2945 = vmatprep.subr.bf16.mxu0 %v2449
  %2946 = vmatpush1.bf16.msra.mxu0 %v2448
  %2947 = vmatprep.subr.bf16.mxu0 0
  %2948 = vmatpush2.bf16.msra.mxu0 0
  %2949 = vmatprep.subr.bf16.mxu0 0
  %2950 = vmatpush2.bf16.msra.mxu0 0
  %2951 = vmatprep.subr.bf16.mxu0 0
  %2952 = vmatpush2.bf16.msra.mxu0 0
  %2953 = vmatprep.subr.bf16.mxu0 0
  %2954 = vmatpush2.bf16.msra.mxu0 0
  %2955 = vmatprep.subr.bf16.mxu0 0
  %2956 = vmatpush2.bf16.msra.mxu0 0
  %2957 = vmatprep.subr.bf16.mxu0 0
  %2958 = vmatpush2.bf16.msra.mxu0 0
  %2959 = vmatprep.subr.bf16.mxu0 0
  %2960 = vmatpush2.bf16.msra.mxu0 0
  %2961 = vmatprep.subr.bf16.mxu0 0
  %2962 = vmatpush2.bf16.msra.mxu0 0
  %2963 = vmatprep.mubr.bf16.mxu0 0
  %2964 = vmatmul.mubr.bf16.gmra.mxu0 %v2628
  %v2965 = vpop.f32.mrf.mxu0
  %v2966 = vadd.f32 %v2134, %v2965
  %v2967 = vpop.f32.mrf.mxu0
  %v2968 = vadd.f32 %v2134, %v2967
  %v2969 = vpop.f32.mrf.mxu0
  %v2970 = vadd.f32 %v2139, %v2969
  %v2971 = vpop.f32.mrf.mxu0
  %v2972 = vadd.f32 %v2139, %v2971
  %2973 = vdwg.mxu0
  %v2974 = vmax.f32 %v2665, 0.0
  %v2975 = vmax.f32 %v2667, 0.0
  %v2976 = vmax.f32 %v2708, 0.0
  %v2977 = vmax.f32 %v2710, 0.0
  %v2978 = vmax.f32 %v2751, 0.0
  %v2979 = vmax.f32 %v2753, 0.0
  %v2980 = vmax.f32 %v2794, 0.0
  %v2981 = vmax.f32 %v2796, 0.0
  %v2982 = vmax.f32 %v2837, 0.0
  %v2983 = vmax.f32 %v2839, 0.0
  %v2984 = vmax.f32 %v2880, 0.0
  %v2985 = vmax.f32 %v2882, 0.0
  %v2986 = vmax.f32 %v2923, 0.0
  %v2987 = vmax.f32 %v2925, 0.0
  %v2988 = vmax.f32 %v2966, 0.0
  %v2989 = vmax.f32 %v2968, 0.0
  %v2990 = vmax.f32 %v2669, 0.0
  %v2991 = vmax.f32 %v2671, 0.0
  %v2992 = vmax.f32 %v2712, 0.0
  %v2993 = vmax.f32 %v2714, 0.0
  %v2994 = vmax.f32 %v2755, 0.0
  %v2995 = vmax.f32 %v2757, 0.0
  %v2996 = vmax.f32 %v2798, 0.0
  %v2997 = vmax.f32 %v2800, 0.0
  %v2998 = vmax.f32 %v2841, 0.0
  %v2999 = vmax.f32 %v2843, 0.0
  %v3000 = vmax.f32 %v2884, 0.0
  %v3001 = vmax.f32 %v2886, 0.0
  %v3002 = vmax.f32 %v2927, 0.0
  %v3003 = vmax.f32 %v2929, 0.0
  %v3004 = vmax.f32 %v2970, 0.0
  %v3005 = vmax.f32 %v2972, 0.0
  %3006 = vset.pattern.permute.xlu0 1
  %3007 = vperm.xlu0 %3006, %v2129
  %v3008 = vpop.permute.xlu0 %3007
  %3010 = vset.pattern.permute.xlu0 1
  %3011 = vperm.xlu0 %3010, %v2130
  %v3012 = vpop.permute.xlu0 %3011
  %v3014 = vmul.f32 %v2974, %v3008
  %v3015 = vmul.f32 %v2975, %v3008
  %v3016 = vmul.f32 %v2976, %v3008
  %v3017 = vmul.f32 %v2977, %v3008
  %v3018 = vmul.f32 %v2978, %v3008
  %v3019 = vmul.f32 %v2979, %v3008
  %v3020 = vmul.f32 %v2980, %v3008
  %v3021 = vmul.f32 %v2981, %v3008
  %v3022 = vmul.f32 %v2982, %v3008
  %v3023 = vmul.f32 %v2983, %v3008
  %v3024 = vmul.f32 %v2984, %v3008
  %v3025 = vmul.f32 %v2985, %v3008
  %v3026 = vmul.f32 %v2986, %v3008
  %v3027 = vmul.f32 %v2987, %v3008
  %v3028 = vmul.f32 %v2988, %v3008
  %v3029 = vmul.f32 %v2989, %v3008
  %v3030 = vmul.f32 %v2990, %v3012
  %v3031 = vmul.f32 %v2991, %v3012
  %v3032 = vmul.f32 %v2992, %v3012
  %v3033 = vmul.f32 %v2993, %v3012
  %v3034 = vmul.f32 %v2994, %v3012
  %v3035 = vmul.f32 %v2995, %v3012
  %v3036 = vmul.f32 %v2996, %v3012
  %v3037 = vmul.f32 %v2997, %v3012
  %v3038 = vmul.f32 %v2998, %v3012
  %v3039 = vmul.f32 %v2999, %v3012
  %v3040 = vmul.f32 %v3000, %v3012
  %v3041 = vmul.f32 %v3001, %v3012
  %v3042 = vmul.f32 %v3002, %v3012
  %v3043 = vmul.f32 %v3003, %v3012
  %v3044 = vmul.f32 %v3004, %v3012
  %v3045 = vmul.f32 %v3005, %v3012
  %3046 = vset.pattern.permute.xlu0 2
  %3047 = vperm.xlu0 %3046, %v2129
  %v3048 = vpop.permute.xlu0 %3047
  %3050 = vset.pattern.permute.xlu0 2
  %3051 = vperm.xlu0 %3050, %v2130
  %v3052 = vpop.permute.xlu0 %3051
  %v3054 = vadd.f32 %v3014, %v3048
  %v3055 = vadd.f32 %v3015, %v3048
  %v3056 = vadd.f32 %v3016, %v3048
  %v3057 = vadd.f32 %v3017, %v3048
  %v3058 = vadd.f32 %v3018, %v3048
  %v3059 = vadd.f32 %v3019, %v3048
  %v3060 = vadd.f32 %v3020, %v3048
  %v3061 = vadd.f32 %v3021, %v3048
  %v3062 = vadd.f32 %v3022, %v3048
  %v3063 = vadd.f32 %v3023, %v3048
  %v3064 = vadd.f32 %v3024, %v3048
  %v3065 = vadd.f32 %v3025, %v3048
  %v3066 = vadd.f32 %v3026, %v3048
  %v3067 = vadd.f32 %v3027, %v3048
  %v3068 = vadd.f32 %v3028, %v3048
  %v3069 = vadd.f32 %v3029, %v3048
  %v3070 = vadd.f32 %v3030, %v3052
  %v3071 = vadd.f32 %v3031, %v3052
  %v3072 = vadd.f32 %v3032, %v3052
  %v3073 = vadd.f32 %v3033, %v3052
  %v3074 = vadd.f32 %v3034, %v3052
  %v3075 = vadd.f32 %v3035, %v3052
  %v3076 = vadd.f32 %v3036, %v3052
  %v3077 = vadd.f32 %v3037, %v3052
  %v3078 = vadd.f32 %v3038, %v3052
  %v3079 = vadd.f32 %v3039, %v3052
  %v3080 = vadd.f32 %v3040, %v3052
  %v3081 = vadd.f32 %v3041, %v3052
  %v3082 = vadd.f32 %v3042, %v3052
  %v3083 = vadd.f32 %v3043, %v3052
  %v3084 = vadd.f32 %v3044, %v3052
  %v3085 = vadd.f32 %v3045, %v3052
  %v3086 = vmax.f32 %v3054, %v3055
  %v3087 = vmax.f32 %v3070, %v3071
  %v3088 = vmax.f32 %v3086, %v3056
  %v3089 = vmax.f32 %v3087, %v3072
  %v3090 = vmax.f32 %v3088, %v3057
  %v3091 = vmax.f32 %v3089, %v3073
  %v3092 = vmax.f32 %v3090, %v3058
  %v3093 = vmax.f32 %v3091, %v3074
  %v3094 = vmax.f32 %v3092, %v3059
  %v3095 = vmax.f32 %v3093, %v3075
  %v3096 = vmax.f32 %v3094, %v3060
  %v3097 = vmax.f32 %v3095, %v3076
  %v3098 = vmax.f32 %v3096, %v3061
  %v3099 = vmax.f32 %v3097, %v3077
  %v3100 = vmax.f32 %v3098, %v3062
  %v3101 = vmax.f32 %v3099, %v3078
  %v3102 = vmax.f32 %v3100, %v3063
  %v3103 = vmax.f32 %v3101, %v3079
  %v3104 = vmax.f32 %v3102, %v3064
  %v3105 = vmax.f32 %v3103, %v3080
  %v3106 = vmax.f32 %v3104, %v3065
  %v3107 = vmax.f32 %v3105, %v3081
  %v3108 = vmax.f32 %v3106, %v3066
  %v3109 = vmax.f32 %v3107, %v3082
  %v3110 = vmax.f32 %v3108, %v3067
  %v3111 = vmax.f32 %v3109, %v3083
  %v3112 = vmax.f32 %v3110, %v3068
  %v3113 = vmax.f32 %v3111, %v3084
  %v3114 = vmax.f32 %v3112, %v3069
  %v3115 = vmax.f32 %v3113, %v3085
  %3116 = vst [vmem:[%s3] sm:$0xff] %v3114
  %3117 = vst [vmem:[%s3 + $0x8] sm:$0xff] %v3115
  // Predicated region
  $region14: #{deepbind_forward.1} parent=0 // pred_check
    _
  $region15: #{deepbind_forward.1} parent=0 // pred_check_branch
    %3119 = sbr.rel (0) target = $region17
  $region16: #{deepbind_forward.1} parent=0 // pred_region
    _
  $region17: #{deepbind_forward.1} parent=0 // pred_fallthru
    _
  // Predicated region
  $region18: #{deepbind_forward.1} parent=0 // pred_check
    _
  $region19: #{deepbind_forward.1} parent=0 // pred_check_branch
    %3121 = sbr.rel (0) target = $region21
  $region20: #{deepbind_forward.1} parent=0 // pred_region
    _
  $region21: #{deepbind_forward.1} parent=0 // pred_fallthru
    _

</llo_original>
